<compile_context>
chip_gen: v7x
topology: tpu7x:2x2x1
jax: 0.10.0
libtpu: 0.0.40
codegen_flags: <defaults>
</compile_context>

<pallas_src>
import jax
import jax.numpy as jnp
from jax.experimental import pallas as pl
from jax.experimental.pallas import tpu as pltpu

EPS = 1e-5


# ----------------------------- in-kernel helpers -----------------------------
def _zero_halo_and_fill(pad_ref, interior):
    """Write `interior` into pad_ref[1:-1, 1:-1, :]; zero only the 1-pixel border."""
    Hh, Wh, C = interior.shape
    pad_ref[0:1, :, :] = jnp.zeros((1, Wh + 2, C), jnp.float32)
    pad_ref[Hh + 1:Hh + 2, :, :] = jnp.zeros((1, Wh + 2, C), jnp.float32)
    pad_ref[1:Hh + 1, 0:1, :] = jnp.zeros((Hh, 1, C), jnp.float32)
    pad_ref[1:Hh + 1, Wh + 1:Wh + 2, :] = jnp.zeros((Hh, 1, C), jnp.float32)
    pad_ref[1:Hh + 1, 1:Wh + 1, :] = interior


def _conv3x3_im2col(pad_ref, w_ref, Hh, Wh, C):
    """3x3 conv over the zero-haloed (Hh+2, Wh+2, C) scratch as one im2col MXU matmul."""
    cols = [pad_ref[dy:dy + Hh, dx:dx + Wh, :] for dy in range(3) for dx in range(3)]
    im = jnp.concatenate(cols, axis=-1).reshape(Hh * Wh, 9 * C)      # (Hh*Wh, 9*C)
    return jnp.dot(im, w_ref[...], preferred_element_type=jnp.float32)


def _write_stats(st_ref, acc, C):
    """Pack per-image sum / sum-of-squares into one (1, 2, C) output block."""
    st_ref[:, 0:1, :] = jnp.sum(acc, axis=0, keepdims=True).reshape(1, 1, C)
    st_ref[:, 1:2, :] = jnp.sum(acc * acc, axis=0, keepdims=True).reshape(1, 1, C)


# ----------------------------- phase 1 kernel -----------------------------
def _pool_conv1_kernel(x_ref, w1_ref, h1_ref, st1_ref, pad_ref):
    """x_ref: (1, Hh, 2, Wh, 2*Cin), w1_ref: (9*Cin, Cmid), h1_ref: (1, Hh*Wh, Cmid),
    st1_ref: (1, 2, Cmid) [sum; sumsq], pad_ref: (Hh+2, Wh+2, Cin) VMEM scratch."""
    _, Hh, _, Wh, C2 = x_ref.shape
    Cin = C2 // 2
    Cmid = w1_ref.shape[1]

    xv = x_ref[0]                                         # (Hh, 2, Wh, 2*Cin)
    rp = jnp.maximum(xv[:, 0], xv[:, 1])                  # max over row pair  -> (Hh, Wh, 2*Cin)
    pooled = jnp.maximum(rp[..., :Cin], rp[..., Cin:])    # max over col pair  -> (Hh, Wh, Cin)

    _zero_halo_and_fill(pad_ref, pooled)
    # conv bias omitted: it is exactly cancelled by the training-mode BN mean subtraction.
    acc = _conv3x3_im2col(pad_ref, w1_ref, Hh, Wh, Cin)   # (Hh*Wh, Cmid), f32

    h1_ref[...] = acc.reshape(1, Hh * Wh, Cmid)
    _write_stats(st1_ref, acc, Cmid)


# ----------------------------- phase 2 kernel -----------------------------
def _bn1_conv2_kernel(h1_ref, s1_ref, t1_ref, w2_ref, h2_ref, st2_ref, pad_ref):
    """h1_ref: (1, Hh*Wh, Cmid), s1/t1: (1, Cmid) fused BN1 scale/shift, w2_ref: (9*Cmid, Cout),
    h2_ref: (1, Hh*Wh, Cout), st2_ref: (1, 2, Cout), pad_ref: (Hh+2, Wh+2, Cmid) scratch."""
    Cmid = h1_ref.shape[2]
    Cout = w2_ref.shape[1]
    Hh = pad_ref.shape[0] - 2
    Wh = pad_ref.shape[1] - 2

    a1 = h1_ref[0]                                              # (Hh*Wh, Cmid)
    y1 = jnp.maximum(a1 * s1_ref[...] + t1_ref[...], 0.0)       # fused BN1 affine + ReLU
    _zero_halo_and_fill(pad_ref, y1.reshape(Hh, Wh, Cmid))
    acc = _conv3x3_im2col(pad_ref, w2_ref, Hh, Wh, Cmid)        # (Hh*Wh, Cout), f32

    h2_ref[...] = acc.reshape(1, Hh * Wh, Cout)
    _write_stats(st2_ref, acc, Cout)


# ----------------------------- phase 3 kernel -----------------------------
def _bn2_relu_kernel(h2_ref, s2_ref, t2_ref, o_ref):
    """Lane-dense fused BN2 affine + ReLU on (Hh, Wh*Cout) row slabs."""
    o_ref[...] = jnp.maximum(h2_ref[...] * s2_ref[...] + t2_ref[...], 0.0)


# ----------------------------- wrapper -----------------------------
@jax.jit
def down_forward(x_nchw, w1, b1, g1, be1, w2, b2, g2, be2):
    """Down.forward. x_nchw: (N, Cin, H, W) f32 -> (N, Cout, H//2, W//2) f32."""
    del b1, b2  # conv bias before training-mode BN cancels exactly (numerically identical)
    N, Cin, H, W = x_nchw.shape
    assert H % 2 == 0 and W % 2 == 0, "even H/W required (MaxPool2d(2) floor not handled)"
    Hh, Wh = H // 2, W // 2
    Cmid = w1.shape[-1]
    Cout = w2.shape[-1]

    # layout glue: NCHW -> NHWC, then a free contiguous reshape exposing the 2x2 pool pairs.
    x = jnp.transpose(x_nchw, (0, 2, 3, 1)).astype(jnp.float32)
    xr = x.reshape(N, Hh, 2, Wh, 2 * Cin)

    # conv weights flattened once in the wrapper; row order matches the in-kernel im2col order.
    w1f = w1.reshape(9 * Cin, Cmid).astype(jnp.float32)
    w2f = w2.reshape(9 * Cmid, Cout).astype(jnp.float32)

    cparams = pltpu.CompilerParams(
        dimension_semantics=("parallel",),        # batch grid -> both TensorCores on v7x
        vmem_limit_bytes=32 * 1024 * 1024)

    # ---------------- phase 1: maxpool + conv1 + BN1 partial stats ----------------
    h1, st1 = pl.pallas_call(
        _pool_conv1_kernel,
        out_shape=(jax.ShapeDtypeStruct((N, Hh * Wh, Cmid), jnp.float32),
                   jax.ShapeDtypeStruct((N, 2, Cmid), jnp.float32)),
        grid_spec=pltpu.PrefetchScalarGridSpec(
            num_scalar_prefetch=0,
            grid=(N,),
            in_specs=[
                pl.BlockSpec((1, Hh, 2, Wh, 2 * Cin), lambda n: (n, 0, 0, 0, 0)),
                pl.BlockSpec((9 * Cin, Cmid), lambda n: (0, 0)),
            ],
            out_specs=[
                pl.BlockSpec((1, Hh * Wh, Cmid), lambda n: (n, 0, 0)),
                pl.BlockSpec((1, 2, Cmid), lambda n: (n, 0, 0)),
            ],
            scratch_shapes=[pltpu.VMEM((Hh + 2, Wh + 2, Cin), jnp.float32)],
        ),
        compiler_params=cparams,
    )(xr, w1f)

    # fold per-image partials -> fused BN1 scale/shift (tiny (C,)-sized XLA math).
    cnt = jnp.float32(N * Hh * Wh)
    mu1 = jnp.sum(st1[:, 0, :], axis=0) / cnt
    var1 = jnp.sum(st1[:, 1, :], axis=0) / cnt - mu1 * mu1
    sc1 = g1.reshape(-1).astype(jnp.float32) * jax.lax.rsqrt(var1 + EPS)
    sh1 = be1.reshape(-1).astype(jnp.float32) - mu1 * sc1

    # ---------------- phase 2: BN1 affine + ReLU + conv2 + BN2 partial stats ----------------
    h2, st2 = pl.pallas_call(
        _bn1_conv2_kernel,
        out_shape=(jax.ShapeDtypeStruct((N, Hh * Wh, Cout), jnp.float32),
                   jax.ShapeDtypeStruct((N, 2, Cout), jnp.float32)),
        grid_spec=pltpu.PrefetchScalarGridSpec(
            num_scalar_prefetch=0,
            grid=(N,),
            in_specs=[
                pl.BlockSpec((1, Hh * Wh, Cmid), lambda n: (n, 0, 0)),
                pl.BlockSpec((1, Cmid), lambda n: (0, 0)),
                pl.BlockSpec((1, Cmid), lambda n: (0, 0)),
                pl.BlockSpec((9 * Cmid, Cout), lambda n: (0, 0)),
            ],
            out_specs=[
                pl.BlockSpec((1, Hh * Wh, Cout), lambda n: (n, 0, 0)),
                pl.BlockSpec((1, 2, Cout), lambda n: (n, 0, 0)),
            ],
            scratch_shapes=[pltpu.VMEM((Hh + 2, Wh + 2, Cmid), jnp.float32)],
        ),
        compiler_params=cparams,
    )(h1, sc1.reshape(1, Cmid), sh1.reshape(1, Cmid), w2f)

    mu2 = jnp.sum(st2[:, 0, :], axis=0) / cnt
    var2 = jnp.sum(st2[:, 1, :], axis=0) / cnt - mu2 * mu2
    sc2 = g2.reshape(-1).astype(jnp.float32) * jax.lax.rsqrt(var2 + EPS)
    sh2 = be2.reshape(-1).astype(jnp.float32) - mu2 * sc2
    # pre-tile the per-channel affine across W so phase 3 runs on lane-dense rows.
    sc2t = jnp.tile(sc2.reshape(1, Cout), (1, Wh))
    sh2t = jnp.tile(sh2.reshape(1, Cout), (1, Wh))

    # ---------------- phase 3: BN2 affine + ReLU on lane-dense (N*Hh, Wh*Cout) slabs ----------------
    h2_rows = h2.reshape(N * Hh, Wh * Cout)        # contiguous reshape: rows=(n,h), lanes=(w,c)
    out2d = pl.pallas_call(
        _bn2_relu_kernel,
        out_shape=jax.ShapeDtypeStruct((N * Hh, Wh * Cout), jnp.float32),
        grid_spec=pltpu.PrefetchScalarGridSpec(
            num_scalar_prefetch=0,
            grid=(N,),
            in_specs=[
                pl.BlockSpec((Hh, Wh * Cout), lambda n: (n, 0)),
                pl.BlockSpec((1, Wh * Cout), lambda n: (0, 0)),
                pl.BlockSpec((1, Wh * Cout), lambda n: (0, 0)),
            ],
            out_specs=pl.BlockSpec((Hh, Wh * Cout), lambda n: (n, 0)),
        ),
        compiler_params=cparams,
    )(h2_rows, sc2t, sh2t)

    out_nhwc = out2d.reshape(N, Hh, Wh, Cout)
    return jnp.transpose(out_nhwc, (0, 3, 1, 2))   # NHWC -> NCHW


# ------------------------- pure-JAX reference (for verification) -------------------------
def down_reference(x_nchw, w1, b1, g1, be1, w2, b2, g2, be2):
    N, C, H, W = x_nchw.shape
    xp = x_nchw.reshape(N, C, H // 2, 2, W // 2, 2).max(axis=(3, 5))

    def conv_bn_relu(h, w, b, g, be):
        wt = jnp.transpose(w, (3, 2, 0, 1))  # HWIO -> OIHW
        y = jax.lax.conv_general_dilated(
            h, wt, window_strides=(1, 1), padding=((1, 1), (1, 1)),
            dimension_numbers=('NCHW', 'OIHW', 'NCHW'))
        y = y + b.reshape(1, -1, 1, 1)
        mu = y.mean(axis=(0, 2, 3), keepdims=True)
        var = ((y - mu) ** 2).mean(axis=(0, 2, 3), keepdims=True)
        y = (y - mu) * jax.lax.rsqrt(var + EPS) * g.reshape(1, -1, 1, 1) + be.reshape(1, -1, 1, 1)
        return jnp.maximum(y, 0.0)

    h = conv_bn_relu(xp, w1, b1, g1, be1)
    return conv_bn_relu(h, w2, b2, g2, be2)


if __name__ == "__main__":
    # Down(in_channels=4, out_channels=8), mid_channels = out_channels = 8
    N, Cin, H, W = 2, 4, 16, 16
    Cmid = Cout = 8

    key = jax.random.PRNGKey(0)
    ks = jax.random.split(key, 9)

    x = jax.random.normal(ks[0], (N, Cin, H, W), jnp.float32)

    # Deterministic synthetic parameters (HWIO conv weights, (1, C) per-channel vectors).
    w1 = 0.1 * jax.random.normal(ks[1], (3, 3, Cin, Cmid), jnp.float32)
    b1 = 0.1 * jax.random.normal(ks[2], (1, Cmid), jnp.float32)
    g1 = 1.0 + 0.1 * jax.random.normal(ks[3], (1, Cmid), jnp.float32)
    be1 = 0.1 * jax.random.normal(ks[4], (1, Cmid), jnp.float32)

    w2 = 0.1 * jax.random.normal(ks[5], (3, 3, Cmid, Cout), jnp.float32)
    b2 = 0.1 * jax.random.normal(ks[6], (1, Cout), jnp.float32)
    g2 = 1.0 + 0.1 * jax.random.normal(ks[7], (1, Cout), jnp.float32)
    be2 = 0.1 * jax.random.normal(ks[8], (1, Cout), jnp.float32)

    out = down_forward(x, w1, b1, g1, be1, w2, b2, g2, be2)
    out = jax.block_until_ready(out)

    ref = down_reference(x, w1, b1, g1, be1, w2, b2, g2, be2)
    assert out.shape == (N, Cout, H // 2, W // 2), out.shape
    assert jnp.allclose(out, ref, atol=1e-4, rtol=1e-4), float(jnp.max(jnp.abs(out - ref)))

    print("KERNEL_OK")
</pallas_src>

<mosaic_0001>
module attributes {stable_mosaic.version = 11 : i64} {
  func.func @_pool_conv1_kernel(%arg0: i32, %arg1: memref<1x8x2x8x8xf32, #tpu.memory_space<vmem>>, %arg2: memref<36x8xf32, #tpu.memory_space<vmem>>, %arg3: memref<1x64x8xf32, #tpu.memory_space<vmem>>, %arg4: memref<1x2x8xf32, #tpu.memory_space<vmem>>, %arg5: memref<10x10x4xf32, #tpu.memory_space<vmem>>) attributes {dimension_semantics = [#tpu.dimension_semantics<parallel>], iteration_bounds = array<i64: 2>, scalar_prefetch = 0 : i64, scratch_operands = 1 : i64, tpu.core_type = #tpu.core_type<tc>, window_params = [{transform_indices = @transform_0, window_bounds = array<i64: 1, 8, 2, 8, 8>}, {pipeline_mode = #tpu.pipeline_mode<synchronous>, transform_indices = @transform_1, window_bounds = array<i64: 36, 8>}, {transform_indices = @transform_2, window_bounds = array<i64: 1, 64, 8>}, {transform_indices = @transform_3, window_bounds = array<i64: 1, 2, 8>}]} {
    %c0 = arith.constant 0 : index
    %c0_0 = arith.constant 0 : index
    %c0_1 = arith.constant 0 : index
    %c0_2 = arith.constant 0 : index
    %c0_3 = arith.constant 0 : index
    %0 = vector.load %arg1[%c0, %c0_0, %c0_1, %c0_2, %c0_3] : memref<1x8x2x8x8xf32, #tpu.memory_space<vmem>>, vector<1x8x2x8x8xf32>
    %1 = vector.shape_cast %0 : vector<1x8x2x8x8xf32> to vector<8x2x8x8xf32>
    %2 = vector.extract_strided_slice %1 {offsets = [0, 0, 0, 0], sizes = [8, 1, 8, 8], strides = [1, 1, 1, 1]} : vector<8x2x8x8xf32> to vector<8x1x8x8xf32>
    %3 = vector.shape_cast %2 : vector<8x1x8x8xf32> to vector<8x8x8xf32>
    %4 = vector.extract_strided_slice %1 {offsets = [0, 1, 0, 0], sizes = [8, 1, 8, 8], strides = [1, 1, 1, 1]} : vector<8x2x8x8xf32> to vector<8x1x8x8xf32>
    %5 = vector.shape_cast %4 : vector<8x1x8x8xf32> to vector<8x8x8xf32>
    %6 = arith.maximumf %3, %5 : vector<8x8x8xf32>
    %7 = vector.extract_strided_slice %6 {offsets = [0, 0, 0], sizes = [8, 8, 4], strides = [1, 1, 1]} : vector<8x8x8xf32> to vector<8x8x4xf32>
    %8 = vector.extract_strided_slice %6 {offsets = [0, 0, 4], sizes = [8, 8, 4], strides = [1, 1, 1]} : vector<8x8x8xf32> to vector<8x8x4xf32>
    %9 = arith.maximumf %7, %8 : vector<8x8x4xf32>
    %cst = arith.constant 0.000000e+00 : f32
    %10 = vector.broadcast %cst : f32 to vector<1x10x4xf32>
    %c0_4 = arith.constant 0 : index
    %c0_5 = arith.constant 0 : index
    %c0_6 = arith.constant 0 : index
    %11 = vector.load %arg5[%c0_4, %c0_5, %c0_6] : memref<10x10x4xf32, #tpu.memory_space<vmem>>, vector<1x10x4xf32>
    tpu.vector_store %arg5[%c0_4, %c0_5, %c0_6], %10 {strides = array<i32>} : memref<10x10x4xf32, #tpu.memory_space<vmem>>, vector<1x10x4xf32>,
    %cst_7 = arith.constant 0.000000e+00 : f32
    %12 = vector.broadcast %cst_7 : f32 to vector<1x10x4xf32>
    %c9 = arith.constant 9 : index
    %c0_8 = arith.constant 0 : index
    %c0_9 = arith.constant 0 : index
    %13 = vector.load %arg5[%c9, %c0_8, %c0_9] : memref<10x10x4xf32, #tpu.memory_space<vmem>>, vector<1x10x4xf32>
    tpu.vector_store %arg5[%c9, %c0_8, %c0_9], %12 {strides = array<i32>} : memref<10x10x4xf32, #tpu.memory_space<vmem>>, vector<1x10x4xf32>,
    %cst_10 = arith.constant 0.000000e+00 : f32
    %14 = vector.broadcast %cst_10 : f32 to vector<8x1x4xf32>
    %c1 = arith.constant 1 : index
    %c0_11 = arith.constant 0 : index
    %c0_12 = arith.constant 0 : index
    %15 = vector.load %arg5[%c1, %c0_11, %c0_12] : memref<10x10x4xf32, #tpu.memory_space<vmem>>, vector<8x1x4xf32>
    tpu.vector_store %arg5[%c1, %c0_11, %c0_12], %14 {strides = array<i32>} : memref<10x10x4xf32, #tpu.memory_space<vmem>>, vector<8x1x4xf32>,
    %cst_13 = arith.constant 0.000000e+00 : f32
    %16 = vector.broadcast %cst_13 : f32 to vector<8x1x4xf32>
    %c1_14 = arith.constant 1 : index
    %c9_15 = arith.constant 9 : index
    %c0_16 = arith.constant 0 : index
    %17 = vector.load %arg5[%c1_14, %c9_15, %c0_16] : memref<10x10x4xf32, #tpu.memory_space<vmem>>, vector<8x1x4xf32>
    tpu.vector_store %arg5[%c1_14, %c9_15, %c0_16], %16 {strides = array<i32>} : memref<10x10x4xf32, #tpu.memory_space<vmem>>, vector<8x1x4xf32>,
    %c1_17 = arith.constant 1 : index
    %c1_18 = arith.constant 1 : index
    %c0_19 = arith.constant 0 : index
    %18 = vector.load %arg5[%c1_17, %c1_18, %c0_19] : memref<10x10x4xf32, #tpu.memory_space<vmem>>, vector<8x8x4xf32>
    tpu.vector_store %arg5[%c1_17, %c1_18, %c0_19], %9 {strides = array<i32>} : memref<10x10x4xf32, #tpu.memory_space<vmem>>, vector<8x8x4xf32>,
    %c0_20 = arith.constant 0 : index
    %c0_21 = arith.constant 0 : index
    %c0_22 = arith.constant 0 : index
    %19 = vector.load %arg5[%c0_20, %c0_21, %c0_22] : memref<10x10x4xf32, #tpu.memory_space<vmem>>, vector<8x8x4xf32>
    %c0_23 = arith.constant 0 : index
    %c1_24 = arith.constant 1 : index
    %c0_25 = arith.constant 0 : index
    %20 = vector.load %arg5[%c0_23, %c1_24, %c0_25] : memref<10x10x4xf32, #tpu.memory_space<vmem>>, vector<8x8x4xf32>
    %c0_26 = arith.constant 0 : index
    %c2 = arith.constant 2 : index
    %c0_27 = arith.constant 0 : index
    %21 = vector.load %arg5[%c0_26, %c2, %c0_27] : memref<10x10x4xf32, #tpu.memory_space<vmem>>, vector<8x8x4xf32>
    %c1_28 = arith.constant 1 : index
    %c0_29 = arith.constant 0 : index
    %c0_30 = arith.constant 0 : index
    %22 = vector.load %arg5[%c1_28, %c0_29, %c0_30] : memref<10x10x4xf32, #tpu.memory_space<vmem>>, vector<8x8x4xf32>
    %c1_31 = arith.constant 1 : index
    %c1_32 = arith.constant 1 : index
    %c0_33 = arith.constant 0 : index
    %23 = vector.load %arg5[%c1_31, %c1_32, %c0_33] : memref<10x10x4xf32, #tpu.memory_space<vmem>>, vector<8x8x4xf32>
    %c1_34 = arith.constant 1 : index
    %c2_35 = arith.constant 2 : index
    %c0_36 = arith.constant 0 : index
    %24 = vector.load %arg5[%c1_34, %c2_35, %c0_36] : memref<10x10x4xf32, #tpu.memory_space<vmem>>, vector<8x8x4xf32>
    %c2_37 = arith.constant 2 : index
    %c0_38 = arith.constant 0 : index
    %c0_39 = arith.constant 0 : index
    %25 = vector.load %arg5[%c2_37, %c0_38, %c0_39] : memref<10x10x4xf32, #tpu.memory_space<vmem>>, vector<8x8x4xf32>
    %c2_40 = arith.constant 2 : index
    %c1_41 = arith.constant 1 : index
    %c0_42 = arith.constant 0 : index
    %26 = vector.load %arg5[%c2_40, %c1_41, %c0_42] : memref<10x10x4xf32, #tpu.memory_space<vmem>>, vector<8x8x4xf32>
    %c2_43 = arith.constant 2 : index
    %c2_44 = arith.constant 2 : index
    %c0_45 = arith.constant 0 : index
    %27 = vector.load %arg5[%c2_43, %c2_44, %c0_45] : memref<10x10x4xf32, #tpu.memory_space<vmem>>, vector<8x8x4xf32>
    %28 = tpu.concatenate %19, %20, %21, %22, %23, %24, %25, %26, %27 in 2 : vector<8x8x4xf32>, vector<8x8x4xf32>, vector<8x8x4xf32>, vector<8x8x4xf32>, vector<8x8x4xf32>, vector<8x8x4xf32>, vector<8x8x4xf32>, vector<8x8x4xf32>, vector<8x8x4xf32> -> vector<8x8x36xf32>
    %29 = vector.shape_cast %28 : vector<8x8x36xf32> to vector<64x36xf32>
    %c0_46 = arith.constant 0 : index
    %c0_47 = arith.constant 0 : index
    %30 = vector.load %arg2[%c0_46, %c0_47] : memref<36x8xf32, #tpu.memory_space<vmem>>, vector<36x8xf32>
    %cst_48 = arith.constant dense<0.000000e+00> : vector<64x8xf32>
    %31 = tpu.matmul %29, %30, %cst_48 {dimension_numbers = #tpu.dot_dimension_numbers<[1], [0], [0], [1], [0, 0, 1, 1], [], []>} : vector<64x36xf32>, vector<36x8xf32>, vector<64x8xf32> -> vector<64x8xf32>
    %32 = vector.shape_cast %31 : vector<64x8xf32> to vector<1x64x8xf32>
    %c0_49 = arith.constant 0 : index
    %c0_50 = arith.constant 0 : index
    %c0_51 = arith.constant 0 : index
    %33 = vector.load %arg3[%c0_49, %c0_50, %c0_51] : memref<1x64x8xf32, #tpu.memory_space<vmem>>, vector<1x64x8xf32>
    tpu.vector_store %arg3[%c0_49, %c0_50, %c0_51], %32 {strides = array<i32>} : memref<1x64x8xf32, #tpu.memory_space<vmem>>, vector<1x64x8xf32>,
    %cst_52 = arith.constant dense<0.000000e+00> : vector<8xf32>
    %34 = vector.multi_reduction <add>, %31, %cst_52 [0] : vector<64x8xf32> to vector<8xf32>
    %35 = vector.shape_cast %34 : vector<8xf32> to vector<1x8xf32>
    %36 = vector.shape_cast %35 : vector<1x8xf32> to vector<1x1x8xf32>
    %c0_53 = arith.constant 0 : index
    %c0_54 = arith.constant 0 : index
    %c0_55 = arith.constant 0 : index
    %37 = vector.load %arg4[%c0_53, %c0_54, %c0_55] : memref<1x2x8xf32, #tpu.memory_space<vmem>>, vector<1x1x8xf32>
    tpu.vector_store %arg4[%c0_53, %c0_54, %c0_55], %36 {strides = array<i32>} : memref<1x2x8xf32, #tpu.memory_space<vmem>>, vector<1x1x8xf32>,
    %38 = arith.mulf %31, %31 : vector<64x8xf32>
    %cst_56 = arith.constant dense<0.000000e+00> : vector<8xf32>
    %39 = vector.multi_reduction <add>, %38, %cst_56 [0] : vector<64x8xf32> to vector<8xf32>
    %40 = vector.shape_cast %39 : vector<8xf32> to vector<1x8xf32>
    %41 = vector.shape_cast %40 : vector<1x8xf32> to vector<1x1x8xf32>
    %c0_57 = arith.constant 0 : index
    %c1_58 = arith.constant 1 : index
    %c0_59 = arith.constant 0 : index
    %42 = vector.load %arg4[%c0_57, %c1_58, %c0_59] : memref<1x2x8xf32, #tpu.memory_space<vmem>>, vector<1x1x8xf32>
    tpu.vector_store %arg4[%c0_57, %c1_58, %c0_59], %41 {strides = array<i32>} : memref<1x2x8xf32, #tpu.memory_space<vmem>>, vector<1x1x8xf32>,
    return
  }
  func.func @transform_0(%arg0: i32) -> (i32, i32, i32, i32, i32) {
    %c0_i32 = arith.constant 0 : i32
    %c0_i32_0 = arith.constant 0 : i32
    %c0_i32_1 = arith.constant 0 : i32
    %c0_i32_2 = arith.constant 0 : i32
    %c0_i32_3 = arith.constant 0 : i32
    return %arg0, %c0_i32, %c0_i32_0, %c0_i32_1, %c0_i32_2 : i32, i32, i32, i32, i32
  }
  func.func @transform_1(%arg0: i32) -> (i32, i32) {
    %c0_i32 = arith.constant 0 : i32
    %c0_i32_0 = arith.constant 0 : i32
    %c0_i32_1 = arith.constant 0 : i32
    return %c0_i32, %c0_i32_0 : i32, i32
  }
  func.func @transform_2(%arg0: i32) -> (i32, i32, i32) {
    %c0_i32 = arith.constant 0 : i32
    %c0_i32_0 = arith.constant 0 : i32
    %c0_i32_1 = arith.constant 0 : i32
    return %arg0, %c0_i32, %c0_i32_0 : i32, i32, i32
  }
  func.func @transform_3(%arg0: i32) -> (i32, i32, i32) {
    %c0_i32 = arith.constant 0 : i32
    %c0_i32_0 = arith.constant 0 : i32
    %c0_i32_1 = arith.constant 0 : i32
    return %arg0, %c0_i32, %c0_i32_0 : i32, i32, i32
  }
}

module attributes {stable_mosaic.version = 11 : i64} {
  func.func @_bn1_conv2_kernel(%arg0: i32, %arg1: memref<1x64x8xf32, #tpu.memory_space<vmem>>, %arg2: memref<1x8xf32, #tpu.memory_space<vmem>>, %arg3: memref<1x8xf32, #tpu.memory_space<vmem>>, %arg4: memref<72x8xf32, #tpu.memory_space<vmem>>, %arg5: memref<1x64x8xf32, #tpu.memory_space<vmem>>, %arg6: memref<1x2x8xf32, #tpu.memory_space<vmem>>, %arg7: memref<10x10x8xf32, #tpu.memory_space<vmem>>) attributes {dimension_semantics = [#tpu.dimension_semantics<parallel>], iteration_bounds = array<i64: 2>, scalar_prefetch = 0 : i64, scratch_operands = 1 : i64, tpu.core_type = #tpu.core_type<tc>, window_params = [{transform_indices = @transform_0, window_bounds = array<i64: 1, 64, 8>}, {pipeline_mode = #tpu.pipeline_mode<synchronous>, transform_indices = @transform_1, window_bounds = array<i64: 1, 8>}, {pipeline_mode = #tpu.pipeline_mode<synchronous>, transform_indices = @transform_2, window_bounds = array<i64: 1, 8>}, {pipeline_mode = #tpu.pipeline_mode<synchronous>, transform_indices = @transform_3, window_bounds = array<i64: 72, 8>}, {transform_indices = @transform_4, window_bounds = array<i64: 1, 64, 8>}, {transform_indices = @transform_5, window_bounds = array<i64: 1, 2, 8>}]} {
    %c0 = arith.constant 0 : index
    %c0_0 = arith.constant 0 : index
    %c0_1 = arith.constant 0 : index
    %0 = vector.load %arg1[%c0, %c0_0, %c0_1] : memref<1x64x8xf32, #tpu.memory_space<vmem>>, vector<1x64x8xf32>
    %1 = vector.shape_cast %0 : vector<1x64x8xf32> to vector<64x8xf32>
    %c0_2 = arith.constant 0 : index
    %c0_3 = arith.constant 0 : index
    %2 = vector.load %arg2[%c0_2, %c0_3] : memref<1x8xf32, #tpu.memory_space<vmem>>, vector<1x8xf32>
    %3 = vector.broadcast %2 : vector<1x8xf32> to vector<64x8xf32>
    %4 = arith.mulf %1, %3 : vector<64x8xf32>
    %c0_4 = arith.constant 0 : index
    %c0_5 = arith.constant 0 : index
    %5 = vector.load %arg3[%c0_4, %c0_5] : memref<1x8xf32, #tpu.memory_space<vmem>>, vector<1x8xf32>
    %6 = vector.broadcast %5 : vector<1x8xf32> to vector<64x8xf32>
    %7 = arith.addf %4, %6 : vector<64x8xf32>
    %cst = arith.constant 0.000000e+00 : f32
    %8 = vector.broadcast %cst : f32 to vector<64x8xf32>
    %9 = arith.maximumf %7, %8 : vector<64x8xf32>
    %10 = vector.shape_cast %9 : vector<64x8xf32> to vector<8x8x8xf32>
    %cst_6 = arith.constant 0.000000e+00 : f32
    %11 = vector.broadcast %cst_6 : f32 to vector<1x10x8xf32>
    %c0_7 = arith.constant 0 : index
    %c0_8 = arith.constant 0 : index
    %c0_9 = arith.constant 0 : index
    %12 = vector.load %arg7[%c0_7, %c0_8, %c0_9] : memref<10x10x8xf32, #tpu.memory_space<vmem>>, vector<1x10x8xf32>
    tpu.vector_store %arg7[%c0_7, %c0_8, %c0_9], %11 {strides = array<i32>} : memref<10x10x8xf32, #tpu.memory_space<vmem>>, vector<1x10x8xf32>,
    %cst_10 = arith.constant 0.000000e+00 : f32
    %13 = vector.broadcast %cst_10 : f32 to vector<1x10x8xf32>
    %c9 = arith.constant 9 : index
    %c0_11 = arith.constant 0 : index
    %c0_12 = arith.constant 0 : index
    %14 = vector.load %arg7[%c9, %c0_11, %c0_12] : memref<10x10x8xf32, #tpu.memory_space<vmem>>, vector<1x10x8xf32>
    tpu.vector_store %arg7[%c9, %c0_11, %c0_12], %13 {strides = array<i32>} : memref<10x10x8xf32, #tpu.memory_space<vmem>>, vector<1x10x8xf32>,
    %cst_13 = arith.constant 0.000000e+00 : f32
    %15 = vector.broadcast %cst_13 : f32 to vector<8x1x8xf32>
    %c1 = arith.constant 1 : index
    %c0_14 = arith.constant 0 : index
    %c0_15 = arith.constant 0 : index
    %16 = vector.load %arg7[%c1, %c0_14, %c0_15] : memref<10x10x8xf32, #tpu.memory_space<vmem>>, vector<8x1x8xf32>
    tpu.vector_store %arg7[%c1, %c0_14, %c0_15], %15 {strides = array<i32>} : memref<10x10x8xf32, #tpu.memory_space<vmem>>, vector<8x1x8xf32>,
    %cst_16 = arith.constant 0.000000e+00 : f32
    %17 = vector.broadcast %cst_16 : f32 to vector<8x1x8xf32>
    %c1_17 = arith.constant 1 : index
    %c9_18 = arith.constant 9 : index
    %c0_19 = arith.constant 0 : index
    %18 = vector.load %arg7[%c1_17, %c9_18, %c0_19] : memref<10x10x8xf32, #tpu.memory_space<vmem>>, vector<8x1x8xf32>
    tpu.vector_store %arg7[%c1_17, %c9_18, %c0_19], %17 {strides = array<i32>} : memref<10x10x8xf32, #tpu.memory_space<vmem>>, vector<8x1x8xf32>,
    %c1_20 = arith.constant 1 : index
    %c1_21 = arith.constant 1 : index
    %c0_22 = arith.constant 0 : index
    %19 = vector.load %arg7[%c1_20, %c1_21, %c0_22] : memref<10x10x8xf32, #tpu.memory_space<vmem>>, vector<8x8x8xf32>
    tpu.vector_store %arg7[%c1_20, %c1_21, %c0_22], %10 {strides = array<i32>} : memref<10x10x8xf32, #tpu.memory_space<vmem>>, vector<8x8x8xf32>,
    %c0_23 = arith.constant 0 : index
    %c0_24 = arith.constant 0 : index
    %c0_25 = arith.constant 0 : index
    %20 = vector.load %arg7[%c0_23, %c0_24, %c0_25] : memref<10x10x8xf32, #tpu.memory_space<vmem>>, vector<8x8x8xf32>
    %c0_26 = arith.constant 0 : index
    %c1_27 = arith.constant 1 : index
    %c0_28 = arith.constant 0 : index
    %21 = vector.load %arg7[%c0_26, %c1_27, %c0_28] : memref<10x10x8xf32, #tpu.memory_space<vmem>>, vector<8x8x8xf32>
    %c0_29 = arith.constant 0 : index
    %c2 = arith.constant 2 : index
    %c0_30 = arith.constant 0 : index
    %22 = vector.load %arg7[%c0_29, %c2, %c0_30] : memref<10x10x8xf32, #tpu.memory_space<vmem>>, vector<8x8x8xf32>
    %c1_31 = arith.constant 1 : index
    %c0_32 = arith.constant 0 : index
    %c0_33 = arith.constant 0 : index
    %23 = vector.load %arg7[%c1_31, %c0_32, %c0_33] : memref<10x10x8xf32, #tpu.memory_space<vmem>>, vector<8x8x8xf32>
    %c1_34 = arith.constant 1 : index
    %c1_35 = arith.constant 1 : index
    %c0_36 = arith.constant 0 : index
    %24 = vector.load %arg7[%c1_34, %c1_35, %c0_36] : memref<10x10x8xf32, #tpu.memory_space<vmem>>, vector<8x8x8xf32>
    %c1_37 = arith.constant 1 : index
    %c2_38 = arith.constant 2 : index
    %c0_39 = arith.constant 0 : index
    %25 = vector.load %arg7[%c1_37, %c2_38, %c0_39] : memref<10x10x8xf32, #tpu.memory_space<vmem>>, vector<8x8x8xf32>
    %c2_40 = arith.constant 2 : index
    %c0_41 = arith.constant 0 : index
    %c0_42 = arith.constant 0 : index
    %26 = vector.load %arg7[%c2_40, %c0_41, %c0_42] : memref<10x10x8xf32, #tpu.memory_space<vmem>>, vector<8x8x8xf32>
    %c2_43 = arith.constant 2 : index
    %c1_44 = arith.constant 1 : index
    %c0_45 = arith.constant 0 : index
    %27 = vector.load %arg7[%c2_43, %c1_44, %c0_45] : memref<10x10x8xf32, #tpu.memory_space<vmem>>, vector<8x8x8xf32>
    %c2_46 = arith.constant 2 : index
    %c2_47 = arith.constant 2 : index
    %c0_48 = arith.constant 0 : index
    %28 = vector.load %arg7[%c2_46, %c2_47, %c0_48] : memref<10x10x8xf32, #tpu.memory_space<vmem>>, vector<8x8x8xf32>
    %29 = tpu.concatenate %20, %21, %22, %23, %24, %25, %26, %27, %28 in 2 : vector<8x8x8xf32>, vector<8x8x8xf32>, vector<8x8x8xf32>, vector<8x8x8xf32>, vector<8x8x8xf32>, vector<8x8x8xf32>, vector<8x8x8xf32>, vector<8x8x8xf32>, vector<8x8x8xf32> -> vector<8x8x72xf32>
    %30 = vector.shape_cast %29 : vector<8x8x72xf32> to vector<64x72xf32>
    %c0_49 = arith.constant 0 : index
    %c0_50 = arith.constant 0 : index
    %31 = vector.load %arg4[%c0_49, %c0_50] : memref<72x8xf32, #tpu.memory_space<vmem>>, vector<72x8xf32>
    %cst_51 = arith.constant dense<0.000000e+00> : vector<64x8xf32>
    %32 = tpu.matmul %30, %31, %cst_51 {dimension_numbers = #tpu.dot_dimension_numbers<[1], [0], [0], [1], [0, 0, 1, 1], [], []>} : vector<64x72xf32>, vector<72x8xf32>, vector<64x8xf32> -> vector<64x8xf32>
    %33 = vector.shape_cast %32 : vector<64x8xf32> to vector<1x64x8xf32>
    %c0_52 = arith.constant 0 : index
    %c0_53 = arith.constant 0 : index
    %c0_54 = arith.constant 0 : index
    %34 = vector.load %arg5[%c0_52, %c0_53, %c0_54] : memref<1x64x8xf32, #tpu.memory_space<vmem>>, vector<1x64x8xf32>
    tpu.vector_store %arg5[%c0_52, %c0_53, %c0_54], %33 {strides = array<i32>} : memref<1x64x8xf32, #tpu.memory_space<vmem>>, vector<1x64x8xf32>,
    %cst_55 = arith.constant dense<0.000000e+00> : vector<8xf32>
    %35 = vector.multi_reduction <add>, %32, %cst_55 [0] : vector<64x8xf32> to vector<8xf32>
    %36 = vector.shape_cast %35 : vector<8xf32> to vector<1x8xf32>
    %37 = vector.shape_cast %36 : vector<1x8xf32> to vector<1x1x8xf32>
    %c0_56 = arith.constant 0 : index
    %c0_57 = arith.constant 0 : index
    %c0_58 = arith.constant 0 : index
    %38 = vector.load %arg6[%c0_56, %c0_57, %c0_58] : memref<1x2x8xf32, #tpu.memory_space<vmem>>, vector<1x1x8xf32>
    tpu.vector_store %arg6[%c0_56, %c0_57, %c0_58], %37 {strides = array<i32>} : memref<1x2x8xf32, #tpu.memory_space<vmem>>, vector<1x1x8xf32>,
    %39 = arith.mulf %32, %32 : vector<64x8xf32>
    %cst_59 = arith.constant dense<0.000000e+00> : vector<8xf32>
    %40 = vector.multi_reduction <add>, %39, %cst_59 [0] : vector<64x8xf32> to vector<8xf32>
    %41 = vector.shape_cast %40 : vector<8xf32> to vector<1x8xf32>
    %42 = vector.shape_cast %41 : vector<1x8xf32> to vector<1x1x8xf32>
    %c0_60 = arith.constant 0 : index
    %c1_61 = arith.constant 1 : index
    %c0_62 = arith.constant 0 : index
    %43 = vector.load %arg6[%c0_60, %c1_61, %c0_62] : memref<1x2x8xf32, #tpu.memory_space<vmem>>, vector<1x1x8xf32>
    tpu.vector_store %arg6[%c0_60, %c1_61, %c0_62], %42 {strides = array<i32>} : memref<1x2x8xf32, #tpu.memory_space<vmem>>, vector<1x1x8xf32>,
    return
  }
  func.func @transform_0(%arg0: i32) -> (i32, i32, i32) {
    %c0_i32 = arith.constant 0 : i32
    %c0_i32_0 = arith.constant 0 : i32
    %c0_i32_1 = arith.constant 0 : i32
    return %arg0, %c0_i32, %c0_i32_0 : i32, i32, i32
  }
  func.func @transform_1(%arg0: i32) -> (i32, i32) {
    %c0_i32 = arith.constant 0 : i32
    %c0_i32_0 = arith.constant 0 : i32
    %c0_i32_1 = arith.constant 0 : i32
    return %c0_i32, %c0_i32_0 : i32, i32
  }
  func.func @transform_2(%arg0: i32) -> (i32, i32) {
    %c0_i32 = arith.constant 0 : i32
    %c0_i32_0 = arith.constant 0 : i32
    %c0_i32_1 = arith.constant 0 : i32
    return %c0_i32, %c0_i32_0 : i32, i32
  }
  func.func @transform_3(%arg0: i32) -> (i32, i32) {
    %c0_i32 = arith.constant 0 : i32
    %c0_i32_0 = arith.constant 0 : i32
    %c0_i32_1 = arith.constant 0 : i32
    return %c0_i32, %c0_i32_0 : i32, i32
  }
  func.func @transform_4(%arg0: i32) -> (i32, i32, i32) {
    %c0_i32 = arith.constant 0 : i32
    %c0_i32_0 = arith.constant 0 : i32
    %c0_i32_1 = arith.constant 0 : i32
    return %arg0, %c0_i32, %c0_i32_0 : i32, i32, i32
  }
  func.func @transform_5(%arg0: i32) -> (i32, i32, i32) {
    %c0_i32 = arith.constant 0 : i32
    %c0_i32_0 = arith.constant 0 : i32
    %c0_i32_1 = arith.constant 0 : i32
    return %arg0, %c0_i32, %c0_i32_0 : i32, i32, i32
  }
}

module attributes {stable_mosaic.version = 11 : i64} {
  func.func @_bn2_relu_kernel(%arg0: i32, %arg1: memref<8x64xf32, #tpu.memory_space<vmem>>, %arg2: memref<1x64xf32, #tpu.memory_space<vmem>>, %arg3: memref<1x64xf32, #tpu.memory_space<vmem>>, %arg4: memref<8x64xf32, #tpu.memory_space<vmem>>) attributes {dimension_semantics = [#tpu.dimension_semantics<parallel>], iteration_bounds = array<i64: 2>, scalar_prefetch = 0 : i64, scratch_operands = 0 : i64, tpu.core_type = #tpu.core_type<tc>, window_params = [{transform_indices = @transform_0, window_bounds = array<i64: 8, 64>}, {pipeline_mode = #tpu.pipeline_mode<synchronous>, transform_indices = @transform_1, window_bounds = array<i64: 1, 64>}, {pipeline_mode = #tpu.pipeline_mode<synchronous>, transform_indices = @transform_2, window_bounds = array<i64: 1, 64>}, {transform_indices = @transform_3, window_bounds = array<i64: 8, 64>}]} {
    %c0 = arith.constant 0 : index
    %c0_0 = arith.constant 0 : index
    %0 = vector.load %arg1[%c0, %c0_0] : memref<8x64xf32, #tpu.memory_space<vmem>>, vector<8x64xf32>
    %c0_1 = arith.constant 0 : index
    %c0_2 = arith.constant 0 : index
    %1 = vector.load %arg2[%c0_1, %c0_2] : memref<1x64xf32, #tpu.memory_space<vmem>>, vector<1x64xf32>
    %2 = vector.broadcast %1 : vector<1x64xf32> to vector<8x64xf32>
    %3 = arith.mulf %0, %2 : vector<8x64xf32>
    %c0_3 = arith.constant 0 : index
    %c0_4 = arith.constant 0 : index
    %4 = vector.load %arg3[%c0_3, %c0_4] : memref<1x64xf32, #tpu.memory_space<vmem>>, vector<1x64xf32>
    %5 = vector.broadcast %4 : vector<1x64xf32> to vector<8x64xf32>
    %6 = arith.addf %3, %5 : vector<8x64xf32>
    %cst = arith.constant 0.000000e+00 : f32
    %7 = vector.broadcast %cst : f32 to vector<8x64xf32>
    %8 = arith.maximumf %6, %7 : vector<8x64xf32>
    %c0_5 = arith.constant 0 : index
    %c0_6 = arith.constant 0 : index
    %9 = vector.load %arg4[%c0_5, %c0_6] : memref<8x64xf32, #tpu.memory_space<vmem>>, vector<8x64xf32>
    tpu.vector_store %arg4[%c0_5, %c0_6], %8 {strides = array<i32>} : memref<8x64xf32, #tpu.memory_space<vmem>>, vector<8x64xf32>,
    return
  }
  func.func @transform_0(%arg0: i32) -> (i32, i32) {
    %c0_i32 = arith.constant 0 : i32
    %c0_i32_0 = arith.constant 0 : i32
    return %arg0, %c0_i32 : i32, i32
  }
  func.func @transform_1(%arg0: i32) -> (i32, i32) {
    %c0_i32 = arith.constant 0 : i32
    %c0_i32_0 = arith.constant 0 : i32
    %c0_i32_1 = arith.constant 0 : i32
    return %c0_i32, %c0_i32_0 : i32, i32
  }
  func.func @transform_2(%arg0: i32) -> (i32, i32) {
    %c0_i32 = arith.constant 0 : i32
    %c0_i32_0 = arith.constant 0 : i32
    %c0_i32_1 = arith.constant 0 : i32
    return %c0_i32, %c0_i32_0 : i32, i32
  }
  func.func @transform_3(%arg0: i32) -> (i32, i32) {
    %c0_i32 = arith.constant 0 : i32
    %c0_i32_0 = arith.constant 0 : i32
    return %arg0, %c0_i32 : i32, i32
  }
}

</mosaic_0001>

<llo_original>
// kernel: down_forward.3
$region0: #{down_forward.3}
  #allocation0 [shape = 'u32[]', space=smem, size = 0x4, offset = 0x4, fixed_abs, tag = 'smem constant byte address 0x4 - core index']
  #allocation1 [shape = 'u32[144,128]{1,0:T(1,128)}', space=vmem, size = 0x12000, scoped, tag = 'internal scratch']
  #allocation2 [shape = 'f32[10,10,4]{2,1,0:T(8,128)}', space=vmem, size = 0x14000, scoped, tag = 'scratch operand']
  %s0 = inlined_call_operand.vmem [shape: f32[2,8,2,8,8], index: 0, kind: input, shape index: {}]
  %s1 = inlined_call_operand.vmem [shape: f32[36,8], index: 1, kind: input, shape index: {}]
  %s2 = inlined_call_operand.vmem [shape: f32[2,64,8], index: 2, kind: output, shape index: {0}]
  %s3 = inlined_call_operand.vmem [shape: f32[2,2,8], index: 3, kind: output, shape index: {1}]
  %4 = xla_tuple %s2, %s3
  %s5 = sld [smem:[#allocation0]]
  $region49: #{down_forward.3} parent=0
    _
  %s7 = ssub.s32 1, %s5
  %s8 = scalar_select 0, %s7, %s5
  loop: start=0, step=1, limit=4
  $region2: #{down_forward.3} parent=0 // loop_pre_header
    _
  $region3: #{down_forward.3} parent=0 // loop_header
    %s10 = sphi 0, %s14
    %p11 = scmp.ge.s32.totalorder %s10, 4
    %s20 = sphi 0, %s22
    %s23 = sphi 0, %s20
    %s24 = sphi 0, %s23
    %s40 = sphi 0, %s24
    %s44 = sphi 0, %s44
    %s46 = sphi 0, %s44
    %s47 = sphi 0, %s46
    %s61 = sphi 0, %s47
    %s67 = sphi 0, %s69
    %s70 = sphi 0, %s67
    %s71 = sphi 0, %s70
    %s87 = sphi 0, %s71
    %s93 = sphi 0, %s95
    %s96 = sphi 0, %s93
    %s97 = sphi 0, %s96
    %s113 = sphi 0, %s97
  $region4: #{down_forward.3} parent=0 // loop_header_branch
    %13 = sbr.rel (%p11) target = $region8
  $region5: #{down_forward.3} parent=0 // loop_body
    %s15 = ssub.s32 %s10, 1
    %s16 = ssub.s32 %s10, 2
    %s17 = sadd.s32 %s10, 1
    %s18 = ssub.s32 %s10, %s17
    %p19 = scmp.eq.s32.totalorder %s18, 0
    %s21 = sadd.s32 %s20, 1
    %s22 = scalar_select %p19, %s20, %s21
    %p25 = pneg %p19
    %p26 = scmp.eq.s32.totalorder %s10, 1
    %p27 = por %p25, %p26
    %p28 = scmp.ne.s32.totalorder %s20, %s23
    %p29 = scmp.eq.s32.totalorder %s10, 0
    %p30 = por %p28, %p29
    %p31 = scmp.ne.s32.totalorder %s20, %s23
    %p32 = scmp.eq.s32.totalorder %s15, 1
    %p33 = por %p31, %p32
    %p34 = scmp.ne.s32.totalorder %s23, %s24
    %p35 = scmp.eq.s32.totalorder %s15, 0
    %p36 = por %p34, %p35
    %p37 = scmp.ne.s32.totalorder %s23, %s24
    %p38 = scmp.eq.s32.totalorder %s16, 1
    %p39 = por %p37, %p38
    %p41 = scmp.ne.s32.totalorder %s24, %s40
    %p42 = scmp.eq.s32.totalorder %s16, 0
    %p43 = por %p41, %p42
    %s45 = sadd.s32 %s44, 1
    %p48 = scmp.eq.s32.totalorder %s10, 1
    %p49 = scmp.ne.s32.totalorder %s44, %s46
    %p50 = scmp.eq.s32.totalorder %s10, 0
    %p51 = por %p49, %p50
    %p52 = scmp.ne.s32.totalorder %s44, %s46
    %p53 = scmp.eq.s32.totalorder %s15, 1
    %p54 = por %p52, %p53
    %p55 = scmp.ne.s32.totalorder %s46, %s47
    %p56 = scmp.eq.s32.totalorder %s15, 0
    %p57 = por %p55, %p56
    %p58 = scmp.ne.s32.totalorder %s46, %s47
    %p59 = scmp.eq.s32.totalorder %s16, 1
    %p60 = por %p58, %p59
    %p62 = scmp.ne.s32.totalorder %s47, %s61
    %p63 = scmp.eq.s32.totalorder %s16, 0
    %p64 = por %p62, %p63
    %s65 = ssub.s32 %s10, %s17
    %p66 = scmp.eq.s32.totalorder %s65, 0
    %s68 = sadd.s32 %s67, 1
    %s69 = scalar_select %p66, %s67, %s68
    %p72 = pneg %p66
    %p73 = scmp.eq.s32.totalorder %s10, 1
    %p74 = por %p72, %p73
    %p75 = scmp.ne.s32.totalorder %s67, %s70
    %p76 = scmp.eq.s32.totalorder %s10, 0
    %p77 = por %p75, %p76
    %p78 = scmp.ne.s32.totalorder %s67, %s70
    %p79 = scmp.eq.s32.totalorder %s15, 1
    %p80 = por %p78, %p79
    %p81 = scmp.ne.s32.totalorder %s70, %s71
    %p82 = scmp.eq.s32.totalorder %s15, 0
    %p83 = por %p81, %p82
    %p84 = scmp.ne.s32.totalorder %s70, %s71
    %p85 = scmp.eq.s32.totalorder %s16, 1
    %p86 = por %p84, %p85
    %p88 = scmp.ne.s32.totalorder %s71, %s87
    %p89 = scmp.eq.s32.totalorder %s16, 0
    %p90 = por %p88, %p89
    %s91 = ssub.s32 %s10, %s17
    %p92 = scmp.eq.s32.totalorder %s91, 0
    %s94 = sadd.s32 %s93, 1
    %s95 = scalar_select %p92, %s93, %s94
    %p98 = pneg %p92
    %p99 = scmp.eq.s32.totalorder %s10, 1
    %p100 = por %p98, %p99
    %p101 = scmp.ne.s32.totalorder %s93, %s96
    %p102 = scmp.eq.s32.totalorder %s10, 0
    %p103 = por %p101, %p102
    %p104 = scmp.ne.s32.totalorder %s93, %s96
    %p105 = scmp.eq.s32.totalorder %s15, 1
    %p106 = por %p104, %p105
    %p107 = scmp.ne.s32.totalorder %s96, %s97
    %p108 = scmp.eq.s32.totalorder %s15, 0
    %p109 = por %p107, %p108
    %p110 = scmp.ne.s32.totalorder %s96, %s97
    %p111 = scmp.eq.s32.totalorder %s16, 1
    %p112 = por %p110, %p111
    %p114 = scmp.ne.s32.totalorder %s97, %s113
    %p115 = scmp.eq.s32.totalorder %s16, 0
    %p116 = por %p114, %p115
    %p117 = scmp.le.s32.totalorder 1, %s10
    %p118 = scmp.lt.s32.totalorder %s10, 3
    %p119 = pnand %p117, %p118
    %p120 = pneg %p119
    // Predicated region
    $region9: #{down_forward.3} parent=5 // pred_check
      _
    $region10: #{down_forward.3} parent=5 // pred_check_branch
      %122 = sbr.rel (%p119) target = $region12
    $region11: #{down_forward.3} parent=5 // pred_region
      %s123 = ssub.s32 %s10, 1
      // Predicated region
      $region13: #{down_forward.3} parent=11 // pred_check
        %p124 = pneg %p57
      $region14: #{down_forward.3} parent=11 // pred_check_branch
        %126 = sbr.rel (%p124) target = $region16
      $region15: #{down_forward.3} parent=11 // pred_region
        _
      $region16: #{down_forward.3} parent=11 // pred_fallthru
        _
    $region12: #{down_forward.3} parent=5 // pred_fallthru
      _
    %p127 = scmp.lt.s32.totalorder %s10, 2
    // Predicated region
    $region17: #{down_forward.3} parent=5 // pred_check
      %p128 = pneg %p127
    $region18: #{down_forward.3} parent=5 // pred_check_branch
      %130 = sbr.rel (%p128) target = $region20
    $region19: #{down_forward.3} parent=5 // pred_region
      // Predicated region
      $region21: #{down_forward.3} parent=19 // pred_check
        %p131 = pneg %p30
      $region22: #{down_forward.3} parent=19 // pred_check_branch
        %133 = sbr.rel (%p131) target = $region24
      $region23: #{down_forward.3} parent=19 // pred_region
        %p134 = scmp.lt.s32.totalorder %s10, 1
        %s135 = scalar_select %p134, %s10, 1
        %s136 = smul.addr %s135, 16
        %s137 = smul.addr %s136, 8
        %s138 = scalar_lea.vmem %s0, %s137
      $region24: #{down_forward.3} parent=19 // pred_fallthru
        _
    $region20: #{down_forward.3} parent=5 // pred_fallthru
      _
    %p139 = scmp.le.s32.totalorder 1, %s10
    %p140 = scmp.lt.s32.totalorder %s10, 3
    %p141 = pnand %p139, %p140
    %p142 = pneg %p141
    // Predicated region
    $region25: #{down_forward.3} parent=5 // pred_check
      _
    $region26: #{down_forward.3} parent=5 // pred_check_branch
      %144 = sbr.rel (%p141) target = $region28
    $region27: #{down_forward.3} parent=5 // pred_region
      %s145 = ssub.s32 %s10, 1
      %p146 = scmp.lt.s32.totalorder %s15, 1
      %s147 = scalar_select %p146, %s15, 1
      %s148 = smul.addr %s147, 16
      %s149 = smul.addr %s148, 8
      %s150 = scalar_lea.vmem %s0, %s149
      %p151 = pneg %p36
      %p152 = pneg %p33
      %p153 = pneg %p57
      %p154 = pneg %p54
      %p155 = pneg %p83
      %p156 = pneg %p80
      %p157 = scmp.lt.s32.totalorder %s15, 1
      %s158 = scalar_select %p157, %s15, 1
      %s159 = smul.addr %s158, 8
      %s160 = smul.addr %s159, 8
      %s161 = scalar_lea.vmem %s2, %s160
      %p162 = pneg %p109
      %p163 = pneg %p106
      %p164 = scmp.lt.s32.totalorder %s15, 1
      %s165 = scalar_select %p164, %s15, 1
      %s166 = smul.addr %s165, 2
      %s167 = scalar_lea.vmem %s3, %s166
      %p168 = scmp.lt.s32.totalorder %s15, 1
      %s169 = scalar_select %p168, %s15, 1
      %s170 = smul.addr %s169, 16
      %s171 = smul.addr %s170, 8
      %s172 = scalar_lea.vmem %s0, %s171
      %p173 = scmp.lt.s32.totalorder %s15, 1
      %s174 = scalar_select %p173, %s15, 1
      %s175 = smul.addr %s174, 8
      %s176 = smul.addr %s175, 8
      %s177 = scalar_lea.vmem %s2, %s176
      %p178 = scmp.lt.s32.totalorder %s15, 1
      %s179 = scalar_select %p178, %s15, 1
      %s180 = smul.addr %s179, 2
      %s181 = scalar_lea.vmem %s3, %s180
      %v182 = vld [vmem:[%s172] sm:$0xff]
      %v183 = vld [vmem:[%s172 + $0x8] sm:$0xff]
      %v184 = vld [vmem:[%s172 + $0x10] sm:$0xff]
      %v185 = vld [vmem:[%s172 + $0x18] sm:$0xff]
      %v186 = vld [vmem:[%s172 + $0x20] sm:$0xff]
      %v187 = vld [vmem:[%s172 + $0x28] sm:$0xff]
      %v188 = vld [vmem:[%s172 + $0x30] sm:$0xff]
      %v189 = vld [vmem:[%s172 + $0x38] sm:$0xff]
      %v190 = vld [vmem:[%s172 + $0x40] sm:$0xff]
      %v191 = vld [vmem:[%s172 + $0x48] sm:$0xff]
      %v192 = vld [vmem:[%s172 + $0x50] sm:$0xff]
      %v193 = vld [vmem:[%s172 + $0x58] sm:$0xff]
      %v194 = vld [vmem:[%s172 + $0x60] sm:$0xff]
      %v195 = vld [vmem:[%s172 + $0x68] sm:$0xff]
      %v196 = vld [vmem:[%s172 + $0x70] sm:$0xff]
      %v197 = vld [vmem:[%s172 + $0x78] sm:$0xff]
      %v198 = vmax.f32 %v182, %v183
      %v199 = vmax.f32 %v184, %v185
      %v200 = vmax.f32 %v186, %v187
      %v201 = vmax.f32 %v188, %v189
      %v202 = vmax.f32 %v190, %v191
      %v203 = vmax.f32 %v192, %v193
      %v204 = vmax.f32 %v194, %v195
      %v205 = vmax.f32 %v196, %v197
      %214 = vrot.lane.b32.xlu0 %v198, 124
      %v215 = vpop.permute.xlu0 %214
      %216 = vrot.lane.b32.xlu0 %v199, 124
      %v217 = vpop.permute.xlu0 %216
      %218 = vrot.lane.b32.xlu0 %v200, 124
      %v219 = vpop.permute.xlu0 %218
      %220 = vrot.lane.b32.xlu0 %v201, 124
      %v221 = vpop.permute.xlu0 %220
      %222 = vrot.lane.b32.xlu0 %v202, 124
      %v223 = vpop.permute.xlu0 %222
      %224 = vrot.lane.b32.xlu0 %v203, 124
      %v225 = vpop.permute.xlu0 %224
      %226 = vrot.lane.b32.xlu0 %v204, 124
      %v227 = vpop.permute.xlu0 %226
      %228 = vrot.lane.b32.xlu0 %v205, 124
      %v229 = vpop.permute.xlu0 %228
      %v238 = vmax.f32 %v198, %v215
      %v239 = vmax.f32 %v199, %v217
      %v240 = vmax.f32 %v200, %v219
      %v241 = vmax.f32 %v201, %v221
      %v242 = vmax.f32 %v202, %v223
      %v243 = vmax.f32 %v203, %v225
      %v244 = vmax.f32 %v204, %v227
      %v245 = vmax.f32 %v205, %v229
      %vm246 = vcmask 31744
      %247 = vst.msk [vmem:[#allocation2] sm:$0xff] %vm246, 0.0
      %vm248 = vcmask 25600
      %249 = vst.msk [vmem:[#allocation2 + $0x8] sm:$0x3] %vm248, 0.0
      %s250 = scalar_lea.vmem [#allocation2], 144
      %251 = vst.msk [vmem:[%s250] sm:$0xff] %vm246, 0.0
      %252 = vst.msk [vmem:[%s250 + $0x8] sm:$0x3] %vm248, 0.0
      %s253 = scalar_lea.vmem [#allocation2], 16
      %vm254 = vcmask 24576
      %255 = vst.msk [vmem:[%s253] sm:$0x1] %vm254, 0.0
      %256 = vst.msk [vmem:[%s253 + $0x10] sm:$0x1] %vm254, 0.0
      %257 = vst.msk [vmem:[%s253 + $0x20] sm:$0x1] %vm254, 0.0
      %258 = vst.msk [vmem:[%s253 + $0x30] sm:$0x1] %vm254, 0.0
      %259 = vst.msk [vmem:[%s253 + $0x40] sm:$0x1] %vm254, 0.0
      %260 = vst.msk [vmem:[%s253 + $0x50] sm:$0x1] %vm254, 0.0
      %261 = vst.msk [vmem:[%s253 + $0x60] sm:$0x1] %vm254, 0.0
      %262 = vst.msk [vmem:[%s253 + $0x70] sm:$0x1] %vm254, 0.0
      %263 = vst.msk [vmem:[%s253 + $0x9] sm:$0x1] %vm254, 0.0
      %264 = vst.msk [vmem:[%s253 + $0x19] sm:$0x1] %vm254, 0.0
      %265 = vst.msk [vmem:[%s253 + $0x29] sm:$0x1] %vm254, 0.0
      %266 = vst.msk [vmem:[%s253 + $0x39] sm:$0x1] %vm254, 0.0
      %267 = vst.msk [vmem:[%s253 + $0x49] sm:$0x1] %vm254, 0.0
      %268 = vst.msk [vmem:[%s253 + $0x59] sm:$0x1] %vm254, 0.0
      %269 = vst.msk [vmem:[%s253 + $0x69] sm:$0x1] %vm254, 0.0
      %270 = vst.msk [vmem:[%s253 + $0x79] sm:$0x1] %vm254, 0.0
      %271 = vst.msk [vmem:[%s253 + $0x1] sm:$0xff] %vm246, %v238
      %272 = vst.msk [vmem:[%s253 + $0x11] sm:$0xff] %vm246, %v239
      %273 = vst.msk [vmem:[%s253 + $0x21] sm:$0xff] %vm246, %v240
      %274 = vst.msk [vmem:[%s253 + $0x31] sm:$0xff] %vm246, %v241
      %275 = vst.msk [vmem:[%s253 + $0x41] sm:$0xff] %vm246, %v242
      %276 = vst.msk [vmem:[%s253 + $0x51] sm:$0xff] %vm246, %v243
      %277 = vst.msk [vmem:[%s253 + $0x61] sm:$0xff] %vm246, %v244
      %278 = vst.msk [vmem:[%s253 + $0x71] sm:$0xff] %vm246, %v245
      %v279 = vld [vmem:[#allocation2] sm:$0xff]
      %v280 = vld [vmem:[#allocation2 + $0x10] sm:$0xff]
      %v281 = vld [vmem:[#allocation2 + $0x20] sm:$0xff]
      %v282 = vld [vmem:[#allocation2 + $0x30] sm:$0xff]
      %v283 = vld [vmem:[#allocation2 + $0x40] sm:$0xff]
      %v284 = vld [vmem:[#allocation2 + $0x50] sm:$0xff]
      %v285 = vld [vmem:[#allocation2 + $0x60] sm:$0xff]
      %v286 = vld [vmem:[#allocation2 + $0x70] sm:$0xff]
      %v287 = vld [vmem:[#allocation2 + $0x1] sm:$0xff]
      %v288 = vld [vmem:[#allocation2 + $0x11] sm:$0xff]
      %v289 = vld [vmem:[#allocation2 + $0x21] sm:$0xff]
      %v290 = vld [vmem:[#allocation2 + $0x31] sm:$0xff]
      %v291 = vld [vmem:[#allocation2 + $0x41] sm:$0xff]
      %v292 = vld [vmem:[#allocation2 + $0x51] sm:$0xff]
      %v293 = vld [vmem:[#allocation2 + $0x61] sm:$0xff]
      %v294 = vld [vmem:[#allocation2 + $0x71] sm:$0xff]
      %v295 = vld [vmem:[#allocation2 + $0x2] sm:$0xff]
      %v296 = vld [vmem:[#allocation2 + $0x12] sm:$0xff]
      %v297 = vld [vmem:[#allocation2 + $0x22] sm:$0xff]
      %v298 = vld [vmem:[#allocation2 + $0x32] sm:$0xff]
      %v299 = vld [vmem:[#allocation2 + $0x42] sm:$0xff]
      %v300 = vld [vmem:[#allocation2 + $0x52] sm:$0xff]
      %v301 = vld [vmem:[#allocation2 + $0x62] sm:$0xff]
      %v302 = vld [vmem:[#allocation2 + $0x72] sm:$0xff]
      %v303 = vld [vmem:[%s253] sm:$0xff]
      %v304 = vld [vmem:[%s253 + $0x10] sm:$0xff]
      %v305 = vld [vmem:[%s253 + $0x20] sm:$0xff]
      %v306 = vld [vmem:[%s253 + $0x30] sm:$0xff]
      %v307 = vld [vmem:[%s253 + $0x40] sm:$0xff]
      %v308 = vld [vmem:[%s253 + $0x50] sm:$0xff]
      %v309 = vld [vmem:[%s253 + $0x60] sm:$0xff]
      %v310 = vld [vmem:[%s253 + $0x70] sm:$0xff]
      %v311 = vld [vmem:[%s253 + $0x1] sm:$0xff]
      %v312 = vld [vmem:[%s253 + $0x11] sm:$0xff]
      %v313 = vld [vmem:[%s253 + $0x21] sm:$0xff]
      %v314 = vld [vmem:[%s253 + $0x31] sm:$0xff]
      %v315 = vld [vmem:[%s253 + $0x41] sm:$0xff]
      %v316 = vld [vmem:[%s253 + $0x51] sm:$0xff]
      %v317 = vld [vmem:[%s253 + $0x61] sm:$0xff]
      %v318 = vld [vmem:[%s253 + $0x71] sm:$0xff]
      %v319 = vld [vmem:[%s253 + $0x2] sm:$0xff]
      %v320 = vld [vmem:[%s253 + $0x12] sm:$0xff]
      %v321 = vld [vmem:[%s253 + $0x22] sm:$0xff]
      %v322 = vld [vmem:[%s253 + $0x32] sm:$0xff]
      %v323 = vld [vmem:[%s253 + $0x42] sm:$0xff]
      %v324 = vld [vmem:[%s253 + $0x52] sm:$0xff]
      %v325 = vld [vmem:[%s253 + $0x62] sm:$0xff]
      %v326 = vld [vmem:[%s253 + $0x72] sm:$0xff]
      %s327 = scalar_lea.vmem [#allocation2], 32
      %v328 = vld [vmem:[%s327] sm:$0xff]
      %v329 = vld [vmem:[%s327 + $0x10] sm:$0xff]
      %v330 = vld [vmem:[%s327 + $0x20] sm:$0xff]
      %v331 = vld [vmem:[%s327 + $0x30] sm:$0xff]
      %v332 = vld [vmem:[%s327 + $0x40] sm:$0xff]
      %v333 = vld [vmem:[%s327 + $0x50] sm:$0xff]
      %v334 = vld [vmem:[%s327 + $0x60] sm:$0xff]
      %v335 = vld [vmem:[%s327 + $0x70] sm:$0xff]
      %v336 = vld [vmem:[%s327 + $0x1] sm:$0xff]
      %v337 = vld [vmem:[%s327 + $0x11] sm:$0xff]
      %v338 = vld [vmem:[%s327 + $0x21] sm:$0xff]
      %v339 = vld [vmem:[%s327 + $0x31] sm:$0xff]
      %v340 = vld [vmem:[%s327 + $0x41] sm:$0xff]
      %v341 = vld [vmem:[%s327 + $0x51] sm:$0xff]
      %v342 = vld [vmem:[%s327 + $0x61] sm:$0xff]
      %v343 = vld [vmem:[%s327 + $0x71] sm:$0xff]
      %v344 = vld [vmem:[%s327 + $0x2] sm:$0xff]
      %v345 = vld [vmem:[%s327 + $0x12] sm:$0xff]
      %v346 = vld [vmem:[%s327 + $0x22] sm:$0xff]
      %v347 = vld [vmem:[%s327 + $0x32] sm:$0xff]
      %v348 = vld [vmem:[%s327 + $0x42] sm:$0xff]
      %v349 = vld [vmem:[%s327 + $0x52] sm:$0xff]
      %v350 = vld [vmem:[%s327 + $0x62] sm:$0xff]
      %v351 = vld [vmem:[%s327 + $0x72] sm:$0xff]
      %360 = vrot.lane.b32.xlu0 %v287, 4
      %v361 = vpop.permute.xlu0 %360
      %362 = vrot.lane.b32.xlu0 %v288, 4
      %v363 = vpop.permute.xlu0 %362
      %364 = vrot.lane.b32.xlu0 %v289, 4
      %v365 = vpop.permute.xlu0 %364
      %366 = vrot.lane.b32.xlu0 %v290, 4
      %v367 = vpop.permute.xlu0 %366
      %368 = vrot.lane.b32.xlu0 %v291, 4
      %v369 = vpop.permute.xlu0 %368
      %370 = vrot.lane.b32.xlu0 %v292, 4
      %v371 = vpop.permute.xlu0 %370
      %372 = vrot.lane.b32.xlu0 %v293, 4
      %v373 = vpop.permute.xlu0 %372
      %374 = vrot.lane.b32.xlu0 %v294, 4
      %v375 = vpop.permute.xlu0 %374
      %392 = vrot.lane.b32.xlu0 %v295, 8
      %v393 = vpop.permute.xlu0 %392
      %394 = vrot.lane.b32.xlu0 %v296, 8
      %v395 = vpop.permute.xlu0 %394
      %396 = vrot.lane.b32.xlu0 %v297, 8
      %v397 = vpop.permute.xlu0 %396
      %398 = vrot.lane.b32.xlu0 %v298, 8
      %v399 = vpop.permute.xlu0 %398
      %400 = vrot.lane.b32.xlu0 %v299, 8
      %v401 = vpop.permute.xlu0 %400
      %402 = vrot.lane.b32.xlu0 %v300, 8
      %v403 = vpop.permute.xlu0 %402
      %404 = vrot.lane.b32.xlu0 %v301, 8
      %v405 = vpop.permute.xlu0 %404
      %406 = vrot.lane.b32.xlu0 %v302, 8
      %v407 = vpop.permute.xlu0 %406
      %424 = vrot.lane.b32.xlu0 %v303, 12
      %v425 = vpop.permute.xlu0 %424
      %426 = vrot.lane.b32.xlu0 %v304, 12
      %v427 = vpop.permute.xlu0 %426
      %428 = vrot.lane.b32.xlu0 %v305, 12
      %v429 = vpop.permute.xlu0 %428
      %430 = vrot.lane.b32.xlu0 %v306, 12
      %v431 = vpop.permute.xlu0 %430
      %432 = vrot.lane.b32.xlu0 %v307, 12
      %v433 = vpop.permute.xlu0 %432
      %434 = vrot.lane.b32.xlu0 %v308, 12
      %v435 = vpop.permute.xlu0 %434
      %436 = vrot.lane.b32.xlu0 %v309, 12
      %v437 = vpop.permute.xlu0 %436
      %438 = vrot.lane.b32.xlu0 %v310, 12
      %v439 = vpop.permute.xlu0 %438
      %456 = vrot.lane.b32.xlu0 %v311, 16
      %v457 = vpop.permute.xlu0 %456
      %458 = vrot.lane.b32.xlu0 %v312, 16
      %v459 = vpop.permute.xlu0 %458
      %460 = vrot.lane.b32.xlu0 %v313, 16
      %v461 = vpop.permute.xlu0 %460
      %462 = vrot.lane.b32.xlu0 %v314, 16
      %v463 = vpop.permute.xlu0 %462
      %464 = vrot.lane.b32.xlu0 %v315, 16
      %v465 = vpop.permute.xlu0 %464
      %466 = vrot.lane.b32.xlu0 %v316, 16
      %v467 = vpop.permute.xlu0 %466
      %468 = vrot.lane.b32.xlu0 %v317, 16
      %v469 = vpop.permute.xlu0 %468
      %470 = vrot.lane.b32.xlu0 %v318, 16
      %v471 = vpop.permute.xlu0 %470
      %488 = vrot.lane.b32.xlu0 %v319, 20
      %v489 = vpop.permute.xlu0 %488
      %490 = vrot.lane.b32.xlu0 %v320, 20
      %v491 = vpop.permute.xlu0 %490
      %492 = vrot.lane.b32.xlu0 %v321, 20
      %v493 = vpop.permute.xlu0 %492
      %494 = vrot.lane.b32.xlu0 %v322, 20
      %v495 = vpop.permute.xlu0 %494
      %496 = vrot.lane.b32.xlu0 %v323, 20
      %v497 = vpop.permute.xlu0 %496
      %498 = vrot.lane.b32.xlu0 %v324, 20
      %v499 = vpop.permute.xlu0 %498
      %500 = vrot.lane.b32.xlu0 %v325, 20
      %v501 = vpop.permute.xlu0 %500
      %502 = vrot.lane.b32.xlu0 %v326, 20
      %v503 = vpop.permute.xlu0 %502
      %520 = vrot.lane.b32.xlu0 %v328, 24
      %v521 = vpop.permute.xlu0 %520
      %522 = vrot.lane.b32.xlu0 %v329, 24
      %v523 = vpop.permute.xlu0 %522
      %524 = vrot.lane.b32.xlu0 %v330, 24
      %v525 = vpop.permute.xlu0 %524
      %526 = vrot.lane.b32.xlu0 %v331, 24
      %v527 = vpop.permute.xlu0 %526
      %528 = vrot.lane.b32.xlu0 %v332, 24
      %v529 = vpop.permute.xlu0 %528
      %530 = vrot.lane.b32.xlu0 %v333, 24
      %v531 = vpop.permute.xlu0 %530
      %532 = vrot.lane.b32.xlu0 %v334, 24
      %v533 = vpop.permute.xlu0 %532
      %534 = vrot.lane.b32.xlu0 %v335, 24
      %v535 = vpop.permute.xlu0 %534
      %552 = vrot.lane.b32.xlu0 %v336, 28
      %v553 = vpop.permute.xlu0 %552
      %554 = vrot.lane.b32.xlu0 %v337, 28
      %v555 = vpop.permute.xlu0 %554
      %556 = vrot.lane.b32.xlu0 %v338, 28
      %v557 = vpop.permute.xlu0 %556
      %558 = vrot.lane.b32.xlu0 %v339, 28
      %v559 = vpop.permute.xlu0 %558
      %560 = vrot.lane.b32.xlu0 %v340, 28
      %v561 = vpop.permute.xlu0 %560
      %562 = vrot.lane.b32.xlu0 %v341, 28
      %v563 = vpop.permute.xlu0 %562
      %564 = vrot.lane.b32.xlu0 %v342, 28
      %v565 = vpop.permute.xlu0 %564
      %566 = vrot.lane.b32.xlu0 %v343, 28
      %v567 = vpop.permute.xlu0 %566
      %584 = vrot.lane.b32.xlu0 %v344, 32
      %v585 = vpop.permute.xlu0 %584
      %586 = vrot.lane.b32.xlu0 %v345, 32
      %v587 = vpop.permute.xlu0 %586
      %588 = vrot.lane.b32.xlu0 %v346, 32
      %v589 = vpop.permute.xlu0 %588
      %590 = vrot.lane.b32.xlu0 %v347, 32
      %v591 = vpop.permute.xlu0 %590
      %592 = vrot.lane.b32.xlu0 %v348, 32
      %v593 = vpop.permute.xlu0 %592
      %594 = vrot.lane.b32.xlu0 %v349, 32
      %v595 = vpop.permute.xlu0 %594
      %596 = vrot.lane.b32.xlu0 %v350, 32
      %v597 = vpop.permute.xlu0 %596
      %598 = vrot.lane.b32.xlu0 %v351, 32
      %v599 = vpop.permute.xlu0 %598
      %v608 = vsel %vm246, %v279, %v361
      %v609 = vsel %vm246, %v280, %v363
      %v610 = vsel %vm246, %v281, %v365
      %v611 = vsel %vm246, %v282, %v367
      %v612 = vsel %vm246, %v283, %v369
      %v613 = vsel %vm246, %v284, %v371
      %v614 = vsel %vm246, %v285, %v373
      %v615 = vsel %vm246, %v286, %v375
      %vm616 = vcmask 64512
      %v617 = vsel %vm616, %v608, %v393
      %v618 = vsel %vm616, %v609, %v395
      %v619 = vsel %vm616, %v610, %v397
      %v620 = vsel %vm616, %v611, %v399
      %v621 = vsel %vm616, %v612, %v401
      %v622 = vsel %vm616, %v613, %v403
      %v623 = vsel %vm616, %v614, %v405
      %v624 = vsel %vm616, %v615, %v407
      %vm625 = vcmask 97280
      %v626 = vsel %vm625, %v617, %v425
      %v627 = vsel %vm625, %v618, %v427
      %v628 = vsel %vm625, %v619, %v429
      %v629 = vsel %vm625, %v620, %v431
      %v630 = vsel %vm625, %v621, %v433
      %v631 = vsel %vm625, %v622, %v435
      %v632 = vsel %vm625, %v623, %v437
      %v633 = vsel %vm625, %v624, %v439
      %vm634 = vcmask 130048
      %v635 = vsel %vm634, %v626, %v457
      %v636 = vsel %vm634, %v627, %v459
      %v637 = vsel %vm634, %v628, %v461
      %v638 = vsel %vm634, %v629, %v463
      %v639 = vsel %vm634, %v630, %v465
      %v640 = vsel %vm634, %v631, %v467
      %v641 = vsel %vm634, %v632, %v469
      %v642 = vsel %vm634, %v633, %v471
      %vm643 = vcmask 162816
      %v644 = vsel %vm643, %v635, %v489
      %v645 = vsel %vm643, %v636, %v491
      %v646 = vsel %vm643, %v637, %v493
      %v647 = vsel %vm643, %v638, %v495
      %v648 = vsel %vm643, %v639, %v497
      %v649 = vsel %vm643, %v640, %v499
      %v650 = vsel %vm643, %v641, %v501
      %v651 = vsel %vm643, %v642, %v503
      %vm652 = vcmask 195584
      %v653 = vsel %vm652, %v644, %v521
      %v654 = vsel %vm652, %v645, %v523
      %v655 = vsel %vm652, %v646, %v525
      %v656 = vsel %vm652, %v647, %v527
      %v657 = vsel %vm652, %v648, %v529
      %v658 = vsel %vm652, %v649, %v531
      %v659 = vsel %vm652, %v650, %v533
      %v660 = vsel %vm652, %v651, %v535
      %vm661 = vcmask 228352
      %v662 = vsel %vm661, %v653, %v553
      %v663 = vsel %vm661, %v654, %v555
      %v664 = vsel %vm661, %v655, %v557
      %v665 = vsel %vm661, %v656, %v559
      %v666 = vsel %vm661, %v657, %v561
      %v667 = vsel %vm661, %v658, %v563
      %v668 = vsel %vm661, %v659, %v565
      %v669 = vsel %vm661, %v660, %v567
      %vm670 = vcmask 261120
      %v671 = vsel %vm670, %v662, %v585
      %v672 = vsel %vm670, %v663, %v587
      %v673 = vsel %vm670, %v664, %v589
      %v674 = vsel %vm670, %v665, %v591
      %v675 = vsel %vm670, %v666, %v593
      %v676 = vsel %vm670, %v667, %v595
      %v677 = vsel %vm670, %v668, %v597
      %v678 = vsel %vm670, %v669, %v599
      %v679 = vld [vmem:[%s1] sm:$0xff]
      %v680 = vld [vmem:[%s1 + $0x8] sm:$0xff]
      %v681 = vld [vmem:[%s1 + $0x10] sm:$0xff]
      %v682 = vld [vmem:[%s1 + $0x18] sm:$0xff]
      %v683 = vld [vmem:[%s1 + $0x20] sm:$0xf]
      %vm684 = vcmask 293888
      %v686 = vsel %vm684, %v671, 0
      %v689 = vsel %vm684, %v672, 0
      %v692 = vsel %vm684, %v673, 0
      %v695 = vsel %vm684, %v674, 0
      %v698 = vsel %vm684, %v675, 0
      %v701 = vsel %vm684, %v676, 0
      %v704 = vsel %vm684, %v677, 0
      %v707 = vsel %vm684, %v678, 0
      %vm709 = vcmask 1043456
      %v711 = vsel %vm709, %v683, 0
      %713 = vmatprep.subr.mxu0 0.0
      %714 = vmatpush1.msra.mxu0 %v679
      %715 = vmatprep.subr.mxu0 0.0
      %716 = vmatpush1.msra.mxu0 %v680
      %717 = vmatprep.subr.mxu0 0.0
      %718 = vmatpush1.msra.mxu0 %v681
      %719 = vmatprep.subr.mxu0 0.0
      %720 = vmatpush1.msra.mxu0 %v682
      %721 = vmatprep.subr.mxu0 0.0
      %722 = vmatpush1.msra.mxu0 %v711
      %723 = vmatprep.subr.mxu0 0.0
      %724 = vmatpush1.msra.mxu0 0.0
      %725 = vmatprep.subr.mxu0 0.0
      %726 = vmatpush1.msra.mxu0 0.0
      %727 = vmatprep.subr.mxu0 0.0
      %728 = vmatpush1.msra.mxu0 0.0
      %729 = vmatprep.subr.mxu0 0.0
      %730 = vmatpush1.msra.mxu0 0.0
      %731 = vmatprep.subr.mxu0 0.0
      %732 = vmatpush1.msra.mxu0 0.0
      %733 = vmatprep.subr.mxu0 0.0
      %734 = vmatpush1.msra.mxu0 0.0
      %735 = vmatprep.subr.mxu0 0.0
      %736 = vmatpush1.msra.mxu0 0.0
      %737 = vmatprep.subr.mxu0 0.0
      %738 = vmatpush1.msra.mxu0 0.0
      %739 = vmatprep.subr.mxu0 0.0
      %740 = vmatpush1.msra.mxu0 0.0
      %741 = vmatprep.subr.mxu0 0.0
      %742 = vmatpush1.msra.mxu0 0.0
      %743 = vmatprep.subr.mxu0 0.0
      %744 = vmatpush1.msra.mxu0 0.0
      %745 = vmatprep.subr.mxu0 0.0
      %746 = vmatpush1.msra.mxu0 0.0
      %747 = vmatprep.subr.mxu0 0.0
      %748 = vmatpush1.msra.mxu0 0.0
      %749 = vmatprep.subr.mxu0 0.0
      %750 = vmatpush1.msra.mxu0 0.0
      %751 = vmatprep.subr.mxu0 0.0
      %752 = vmatpush1.msra.mxu0 0.0
      %753 = vmatprep.subr.mxu0 0.0
      %754 = vmatpush1.msra.mxu0 0.0
      %755 = vmatprep.subr.mxu0 0.0
      %756 = vmatpush1.msra.mxu0 0.0
      %757 = vmatprep.subr.mxu0 0.0
      %758 = vmatpush1.msra.mxu0 0.0
      %759 = vmatprep.subr.mxu0 0.0
      %760 = vmatpush1.msra.mxu0 0.0
      %761 = vmatprep.subr.mxu0 0.0
      %762 = vmatpush1.msra.mxu0 0.0
      %763 = vmatprep.subr.mxu0 0.0
      %764 = vmatpush1.msra.mxu0 0.0
      %765 = vmatprep.subr.mxu0 0.0
      %766 = vmatpush1.msra.mxu0 0.0
      %767 = vmatprep.subr.mxu0 0.0
      %768 = vmatpush1.msra.mxu0 0.0
      %769 = vmatprep.subr.mxu0 0.0
      %770 = vmatpush1.msra.mxu0 0.0
      %771 = vmatprep.subr.mxu0 0.0
      %772 = vmatpush1.msra.mxu0 0.0
      %773 = vmatprep.subr.mxu0 0.0
      %774 = vmatpush1.msra.mxu0 0.0
      %775 = vmatprep.subr.mxu0 0.0
      %776 = vmatpush1.msra.mxu0 0.0
      %777 = vmatprep.mubr.f32.mxu0 0.0
      %778 = vmatmul.mubr.f32.gmra.mrb[0].mxu0 %v686
      %v779 = vpop.f32.mrb[0].mxu0
      %v780 = vadd.f32 0.0, %v779
      %v781 = vpop.f32.mrb[0].mxu0
      %782 = vmatprep.mubr.f32.mxu0 0.0
      %783 = vmatmul.mubr.f32.gmra.mrb[0].mxu0 %v689
      %v784 = vpop.f32.mrb[0].mxu0
      %v785 = vadd.f32 0.0, %v784
      %v786 = vpop.f32.mrb[0].mxu0
      %787 = vmatprep.mubr.f32.mxu0 0.0
      %788 = vmatmul.mubr.f32.gmra.mrb[0].mxu0 %v692
      %v789 = vpop.f32.mrb[0].mxu0
      %v790 = vadd.f32 0.0, %v789
      %v791 = vpop.f32.mrb[0].mxu0
      %792 = vmatprep.mubr.f32.mxu0 0.0
      %793 = vmatmul.mubr.f32.gmra.mrb[0].mxu0 %v695
      %v794 = vpop.f32.mrb[0].mxu0
      %v795 = vadd.f32 0.0, %v794
      %v796 = vpop.f32.mrb[0].mxu0
      %797 = vmatprep.mubr.f32.mxu0 0.0
      %798 = vmatmul.mubr.f32.gmra.mrb[0].mxu0 %v698
      %v799 = vpop.f32.mrb[0].mxu0
      %v800 = vadd.f32 0.0, %v799
      %v801 = vpop.f32.mrb[0].mxu0
      %802 = vmatprep.mubr.f32.mxu0 0.0
      %803 = vmatmul.mubr.f32.gmra.mrb[0].mxu0 %v701
      %v804 = vpop.f32.mrb[0].mxu0
      %v805 = vadd.f32 0.0, %v804
      %v806 = vpop.f32.mrb[0].mxu0
      %807 = vmatprep.mubr.f32.mxu0 0.0
      %808 = vmatmul.mubr.f32.gmra.mrb[0].mxu0 %v704
      %v809 = vpop.f32.mrb[0].mxu0
      %v810 = vadd.f32 0.0, %v809
      %v811 = vpop.f32.mrb[0].mxu0
      %812 = vmatprep.mubr.f32.mxu0 0.0
      %813 = vmatmul.mubr.f32.gmra.mrb[0].mxu0 %v707
      %v814 = vpop.f32.mrb[0].mxu0
      %v815 = vadd.f32 0.0, %v814
      %v816 = vpop.f32.mrb[0].mxu0
      %817 = vdwg.mxu0
      %818 = vst.msk [vmem:[%s177] sm:$0xff] %vm616, %v780
      %819 = vst.msk [vmem:[%s177 + $0x8] sm:$0xff] %vm616, %v785
      %820 = vst.msk [vmem:[%s177 + $0x10] sm:$0xff] %vm616, %v790
      %821 = vst.msk [vmem:[%s177 + $0x18] sm:$0xff] %vm616, %v795
      %822 = vst.msk [vmem:[%s177 + $0x20] sm:$0xff] %vm616, %v800
      %823 = vst.msk [vmem:[%s177 + $0x28] sm:$0xff] %vm616, %v805
      %824 = vst.msk [vmem:[%s177 + $0x30] sm:$0xff] %vm616, %v810
      %825 = vst.msk [vmem:[%s177 + $0x38] sm:$0xff] %vm616, %v815
      %v826 = vsel %vm616, %v780, 0.0
      %v827 = vsel %vm616, %v785, 0.0
      %v828 = vadd.f32 %v826, %v827
      %v829 = vsel %vm616, %v790, 0.0
      %v830 = vadd.f32 %v828, %v829
      %v831 = vsel %vm616, %v795, 0.0
      %v832 = vadd.f32 %v830, %v831
      %v833 = vsel %vm616, %v800, 0.0
      %v834 = vadd.f32 %v832, %v833
      %v835 = vsel %vm616, %v805, 0.0
      %v836 = vadd.f32 %v834, %v835
      %v837 = vsel %vm616, %v810, 0.0
      %v838 = vadd.f32 %v836, %v837
      %v839 = vsel %vm616, %v815, 0.0
      %v840 = vadd.f32 %v838, %v839
      %v841 = vrot.slane %v840, 4
      %v842 = vadd.f32 %v840, %v841
      %v843 = vrot.slane %v842, 2
      %v844 = vadd.f32 %v842, %v843
      %v845 = vrot.slane %v844, 1
      %v846 = vadd.f32 %v844, %v845
      %vm847 = vcmask 57344
      %848 = vst.msk [vmem:[%s181] sm:$0x1] %vm847, %v846
      %v849 = vmul.f32 %v780, %v780
      %v850 = vmul.f32 %v785, %v785
      %v851 = vmul.f32 %v790, %v790
      %v852 = vmul.f32 %v795, %v795
      %v853 = vmul.f32 %v800, %v800
      %v854 = vmul.f32 %v805, %v805
      %v855 = vmul.f32 %v810, %v810
      %v856 = vmul.f32 %v815, %v815
      %v857 = vsel %vm616, %v849, 0.0
      %v858 = vsel %vm616, %v850, 0.0
      %v859 = vadd.f32 %v857, %v858
      %v860 = vsel %vm616, %v851, 0.0
      %v861 = vadd.f32 %v859, %v860
      %v862 = vsel %vm616, %v852, 0.0
      %v863 = vadd.f32 %v861, %v862
      %v864 = vsel %vm616, %v853, 0.0
      %v865 = vadd.f32 %v863, %v864
      %v866 = vsel %vm616, %v854, 0.0
      %v867 = vadd.f32 %v865, %v866
      %v868 = vsel %vm616, %v855, 0.0
      %v869 = vadd.f32 %v867, %v868
      %v870 = vsel %vm616, %v856, 0.0
      %v871 = vadd.f32 %v869, %v870
      %v872 = vrot.slane %v871, 4
      %v873 = vadd.f32 %v871, %v872
      %v874 = vrot.slane %v873, 2
      %v875 = vadd.f32 %v873, %v874
      %v876 = vrot.slane %v875, 1
      %v877 = vadd.f32 %v875, %v876
      %878 = vst.msk [vmem:[%s181 + $0x1] sm:$0x1] %vm847, %v877
      %p879 = scmp.lt.s32.totalorder %s15, 1
      %s880 = scalar_select %p879, %s15, 1
      %s881 = smul.addr %s880, 8
      %s882 = smul.addr %s881, 8
      %s883 = scalar_lea.vmem %s2, %s882
      %p884 = scmp.lt.s32.totalorder %s15, 1
      %s885 = scalar_select %p884, %s15, 1
      %s886 = smul.addr %s885, 2
      %s887 = scalar_lea.vmem %s3, %s886
      // Predicated region
      $region29: #{down_forward.3} parent=27 // pred_check
        %p888 = pneg %p80
      $region30: #{down_forward.3} parent=27 // pred_check_branch
        %890 = sbr.rel (%p888) target = $region32
      $region31: #{down_forward.3} parent=27 // pred_region
        _
      $region32: #{down_forward.3} parent=27 // pred_fallthru
        _
      // Predicated region
      $region33: #{down_forward.3} parent=27 // pred_check
        %p891 = pneg %p106
      $region34: #{down_forward.3} parent=27 // pred_check_branch
        %893 = sbr.rel (%p891) target = $region36
      $region35: #{down_forward.3} parent=27 // pred_region
        _
      $region36: #{down_forward.3} parent=27 // pred_fallthru
        _
    $region28: #{down_forward.3} parent=5 // pred_fallthru
      _
    %p894 = scmp.le.s32.totalorder 2, %s10
    // Predicated region
    $region37: #{down_forward.3} parent=5 // pred_check
      %p895 = pneg %p894
    $region38: #{down_forward.3} parent=5 // pred_check_branch
      %897 = sbr.rel (%p895) target = $region40
    $region39: #{down_forward.3} parent=5 // pred_region
      %s898 = ssub.s32 %s10, 2
      // Predicated region
      $region41: #{down_forward.3} parent=39 // pred_check
        %p899 = pneg %p86
      $region42: #{down_forward.3} parent=39 // pred_check_branch
        %901 = sbr.rel (%p899) target = $region44
      $region43: #{down_forward.3} parent=39 // pred_region
        %p902 = scmp.lt.s32.totalorder %s16, 1
        %s903 = scalar_select %p902, %s16, 1
        %s904 = smul.addr %s903, 8
        %s905 = smul.addr %s904, 8
        %s906 = scalar_lea.vmem %s2, %s905
      $region44: #{down_forward.3} parent=39 // pred_fallthru
        _
      // Predicated region
      $region45: #{down_forward.3} parent=39 // pred_check
        %p907 = pneg %p112
      $region46: #{down_forward.3} parent=39 // pred_check_branch
        %909 = sbr.rel (%p907) target = $region48
      $region47: #{down_forward.3} parent=39 // pred_region
        %p910 = scmp.lt.s32.totalorder %s16, 1
        %s911 = scalar_select %p910, %s16, 1
        %s912 = smul.addr %s911, 2
        %s913 = scalar_lea.vmem %s3, %s912
      $region48: #{down_forward.3} parent=39 // pred_fallthru
        _
    $region40: #{down_forward.3} parent=5 // pred_fallthru
      _
  $region6: #{down_forward.3} parent=0 // loop_footer
    %s14 = sadd.s32 1, %s10
  $region7: #{down_forward.3} parent=0 // loop_footer_branch
    %9 = sbr.rel target = $region3
  $region8: #{down_forward.3} parent=0 // loop_exit
    _

// kernel: down_forward.5
$region0: #{down_forward.5}
  #allocation0 [shape = 'u32[]', space=smem, size = 0x4, offset = 0x4, fixed_abs, tag = 'smem constant byte address 0x4 - core index']
  #allocation1 [shape = 'u32[144,128]{1,0:T(1,128)}', space=vmem, size = 0x12000, scoped, tag = 'internal scratch']
  %s0 = inlined_call_operand.vmem [shape: f32[16,64], index: 0, kind: input, shape index: {}]
  %s1 = inlined_call_operand.vmem [shape: f32[1,64], index: 1, kind: input, shape index: {}]
  %s2 = inlined_call_operand.vmem [shape: f32[1,64], index: 2, kind: input, shape index: {}]
  %s3 = inlined_call_operand.vmem [shape: f32[16,64], index: 3, kind: output, shape index: {}]
  %s4 = sld [smem:[#allocation0]]
  $region45: #{down_forward.5} parent=0
    _
  %s6 = ssub.s32 1, %s4
  %s7 = scalar_select 0, %s6, %s4
  loop: start=0, step=1, limit=4
  $region2: #{down_forward.5} parent=0 // loop_pre_header
    _
  $region3: #{down_forward.5} parent=0 // loop_header
    %s9 = sphi 0, %s13
    %p10 = scmp.ge.s32.totalorder %s9, 4
    %s19 = sphi 0, %s21
    %s22 = sphi 0, %s19
    %s23 = sphi 0, %s22
    %s39 = sphi 0, %s23
    %s43 = sphi 0, %s43
    %s45 = sphi 0, %s43
    %s46 = sphi 0, %s45
    %s60 = sphi 0, %s46
    %s64 = sphi 0, %s64
    %s66 = sphi 0, %s64
    %s67 = sphi 0, %s66
    %s81 = sphi 0, %s67
    %s87 = sphi 0, %s89
    %s90 = sphi 0, %s87
    %s91 = sphi 0, %s90
    %s107 = sphi 0, %s91
  $region4: #{down_forward.5} parent=0 // loop_header_branch
    %12 = sbr.rel (%p10) target = $region8
  $region5: #{down_forward.5} parent=0 // loop_body
    %s14 = ssub.s32 %s9, 1
    %s15 = ssub.s32 %s9, 2
    %s16 = sadd.s32 %s9, 1
    %s17 = ssub.s32 %s9, %s16
    %p18 = scmp.eq.s32.totalorder %s17, 0
    %s20 = sadd.s32 %s19, 1
    %s21 = scalar_select %p18, %s19, %s20
    %p24 = pneg %p18
    %p25 = scmp.eq.s32.totalorder %s9, 1
    %p26 = por %p24, %p25
    %p27 = scmp.ne.s32.totalorder %s19, %s22
    %p28 = scmp.eq.s32.totalorder %s9, 0
    %p29 = por %p27, %p28
    %p30 = scmp.ne.s32.totalorder %s19, %s22
    %p31 = scmp.eq.s32.totalorder %s14, 1
    %p32 = por %p30, %p31
    %p33 = scmp.ne.s32.totalorder %s22, %s23
    %p34 = scmp.eq.s32.totalorder %s14, 0
    %p35 = por %p33, %p34
    %p36 = scmp.ne.s32.totalorder %s22, %s23
    %p37 = scmp.eq.s32.totalorder %s15, 1
    %p38 = por %p36, %p37
    %p40 = scmp.ne.s32.totalorder %s23, %s39
    %p41 = scmp.eq.s32.totalorder %s15, 0
    %p42 = por %p40, %p41
    %s44 = sadd.s32 %s43, 1
    %p47 = scmp.eq.s32.totalorder %s9, 1
    %p48 = scmp.ne.s32.totalorder %s43, %s45
    %p49 = scmp.eq.s32.totalorder %s9, 0
    %p50 = por %p48, %p49
    %p51 = scmp.ne.s32.totalorder %s43, %s45
    %p52 = scmp.eq.s32.totalorder %s14, 1
    %p53 = por %p51, %p52
    %p54 = scmp.ne.s32.totalorder %s45, %s46
    %p55 = scmp.eq.s32.totalorder %s14, 0
    %p56 = por %p54, %p55
    %p57 = scmp.ne.s32.totalorder %s45, %s46
    %p58 = scmp.eq.s32.totalorder %s15, 1
    %p59 = por %p57, %p58
    %p61 = scmp.ne.s32.totalorder %s46, %s60
    %p62 = scmp.eq.s32.totalorder %s15, 0
    %p63 = por %p61, %p62
    %s65 = sadd.s32 %s64, 1
    %p68 = scmp.eq.s32.totalorder %s9, 1
    %p69 = scmp.ne.s32.totalorder %s64, %s66
    %p70 = scmp.eq.s32.totalorder %s9, 0
    %p71 = por %p69, %p70
    %p72 = scmp.ne.s32.totalorder %s64, %s66
    %p73 = scmp.eq.s32.totalorder %s14, 1
    %p74 = por %p72, %p73
    %p75 = scmp.ne.s32.totalorder %s66, %s67
    %p76 = scmp.eq.s32.totalorder %s14, 0
    %p77 = por %p75, %p76
    %p78 = scmp.ne.s32.totalorder %s66, %s67
    %p79 = scmp.eq.s32.totalorder %s15, 1
    %p80 = por %p78, %p79
    %p82 = scmp.ne.s32.totalorder %s67, %s81
    %p83 = scmp.eq.s32.totalorder %s15, 0
    %p84 = por %p82, %p83
    %s85 = ssub.s32 %s9, %s16
    %p86 = scmp.eq.s32.totalorder %s85, 0
    %s88 = sadd.s32 %s87, 1
    %s89 = scalar_select %p86, %s87, %s88
    %p92 = pneg %p86
    %p93 = scmp.eq.s32.totalorder %s9, 1
    %p94 = por %p92, %p93
    %p95 = scmp.ne.s32.totalorder %s87, %s90
    %p96 = scmp.eq.s32.totalorder %s9, 0
    %p97 = por %p95, %p96
    %p98 = scmp.ne.s32.totalorder %s87, %s90
    %p99 = scmp.eq.s32.totalorder %s14, 1
    %p100 = por %p98, %p99
    %p101 = scmp.ne.s32.totalorder %s90, %s91
    %p102 = scmp.eq.s32.totalorder %s14, 0
    %p103 = por %p101, %p102
    %p104 = scmp.ne.s32.totalorder %s90, %s91
    %p105 = scmp.eq.s32.totalorder %s15, 1
    %p106 = por %p104, %p105
    %p108 = scmp.ne.s32.totalorder %s91, %s107
    %p109 = scmp.eq.s32.totalorder %s15, 0
    %p110 = por %p108, %p109
    %p111 = scmp.le.s32.totalorder 1, %s9
    %p112 = scmp.lt.s32.totalorder %s9, 3
    %p113 = pnand %p111, %p112
    %p114 = pneg %p113
    // Predicated region
    $region9: #{down_forward.5} parent=5 // pred_check
      _
    $region10: #{down_forward.5} parent=5 // pred_check_branch
      %116 = sbr.rel (%p113) target = $region12
    $region11: #{down_forward.5} parent=5 // pred_region
      %s117 = ssub.s32 %s9, 1
      // Predicated region
      $region13: #{down_forward.5} parent=11 // pred_check
        %p118 = pneg %p56
      $region14: #{down_forward.5} parent=11 // pred_check_branch
        %120 = sbr.rel (%p118) target = $region16
      $region15: #{down_forward.5} parent=11 // pred_region
        _
      $region16: #{down_forward.5} parent=11 // pred_fallthru
        _
      // Predicated region
      $region17: #{down_forward.5} parent=11 // pred_check
        %p121 = pneg %p77
      $region18: #{down_forward.5} parent=11 // pred_check_branch
        %123 = sbr.rel (%p121) target = $region20
      $region19: #{down_forward.5} parent=11 // pred_region
        _
      $region20: #{down_forward.5} parent=11 // pred_fallthru
        _
    $region12: #{down_forward.5} parent=5 // pred_fallthru
      _
    %p124 = scmp.lt.s32.totalorder %s9, 2
    // Predicated region
    $region21: #{down_forward.5} parent=5 // pred_check
      %p125 = pneg %p124
    $region22: #{down_forward.5} parent=5 // pred_check_branch
      %127 = sbr.rel (%p125) target = $region24
    $region23: #{down_forward.5} parent=5 // pred_region
      // Predicated region
      $region25: #{down_forward.5} parent=23 // pred_check
        %p128 = pneg %p29
      $region26: #{down_forward.5} parent=23 // pred_check_branch
        %130 = sbr.rel (%p128) target = $region28
      $region27: #{down_forward.5} parent=23 // pred_region
        %p131 = scmp.lt.s32.totalorder %s9, 1
        %s132 = scalar_select %p131, %s9, 1
        %s133 = smul.addr %s132, 8
        %s134 = scalar_lea.vmem %s0, %s133
      $region28: #{down_forward.5} parent=23 // pred_fallthru
        _
    $region24: #{down_forward.5} parent=5 // pred_fallthru
      _
    %p135 = scmp.le.s32.totalorder 1, %s9
    %p136 = scmp.lt.s32.totalorder %s9, 3
    %p137 = pnand %p135, %p136
    %p138 = pneg %p137
    // Predicated region
    $region29: #{down_forward.5} parent=5 // pred_check
      _
    $region30: #{down_forward.5} parent=5 // pred_check_branch
      %140 = sbr.rel (%p137) target = $region32
    $region31: #{down_forward.5} parent=5 // pred_region
      %s141 = ssub.s32 %s9, 1
      %p142 = scmp.lt.s32.totalorder %s14, 1
      %s143 = scalar_select %p142, %s14, 1
      %s144 = smul.addr %s143, 8
      %s145 = scalar_lea.vmem %s0, %s144
      %p146 = pneg %p35
      %p147 = pneg %p32
      %p148 = pneg %p56
      %p149 = pneg %p53
      %p150 = pneg %p77
      %p151 = pneg %p74
      %p152 = pneg %p103
      %p153 = pneg %p100
      %p154 = scmp.lt.s32.totalorder %s14, 1
      %s155 = scalar_select %p154, %s14, 1
      %s156 = smul.addr %s155, 8
      %s157 = scalar_lea.vmem %s3, %s156
      %p158 = scmp.lt.s32.totalorder %s14, 1
      %s159 = scalar_select %p158, %s14, 1
      %s160 = smul.addr %s159, 8
      %s161 = scalar_lea.vmem %s0, %s160
      %p162 = scmp.lt.s32.totalorder %s14, 1
      %s163 = scalar_select %p162, %s14, 1
      %s164 = smul.addr %s163, 8
      %s165 = scalar_lea.vmem %s3, %s164
      %v166 = vld [vmem:[%s161] sm:$0xff]
      %v167 = vld [vmem:[%s1] sm:$0x1]
      %v169 = vlaneseq
      %v170 = vshrl.u32 %v169, 7
      %v171 = vsub.s32 0, %v170
      %v172 = vrot.slane %v167, %v171
      %v174 = vmul.f32 %v166, %v172
      %v175 = vld [vmem:[%s2] sm:$0x1]
      %v177 = vlaneseq
      %v178 = vshrl.u32 %v177, 7
      %v179 = vsub.s32 0, %v178
      %v180 = vrot.slane %v175, %v179
      %v182 = vadd.f32 %v174, %v180
      %v183 = vmax.f32 %v182, 0.0
      %vm184 = vcmask 523264
      %185 = vst.msk [vmem:[%s165] sm:$0xff] %vm184, %v183
      %p186 = scmp.lt.s32.totalorder %s14, 1
      %s187 = scalar_select %p186, %s14, 1
      %s188 = smul.addr %s187, 8
      %s189 = scalar_lea.vmem %s3, %s188
      // Predicated region
      $region33: #{down_forward.5} parent=31 // pred_check
        %p190 = pneg %p100
      $region34: #{down_forward.5} parent=31 // pred_check_branch
        %192 = sbr.rel (%p190) target = $region36
      $region35: #{down_forward.5} parent=31 // pred_region
        _
      $region36: #{down_forward.5} parent=31 // pred_fallthru
        _
    $region32: #{down_forward.5} parent=5 // pred_fallthru
      _
    %p193 = scmp.le.s32.totalorder 2, %s9
    // Predicated region
    $region37: #{down_forward.5} parent=5 // pred_check
      %p194 = pneg %p193
    $region38: #{down_forward.5} parent=5 // pred_check_branch
      %196 = sbr.rel (%p194) target = $region40
    $region39: #{down_forward.5} parent=5 // pred_region
      %s197 = ssub.s32 %s9, 2
      // Predicated region
      $region41: #{down_forward.5} parent=39 // pred_check
        %p198 = pneg %p106
      $region42: #{down_forward.5} parent=39 // pred_check_branch
        %200 = sbr.rel (%p198) target = $region44
      $region43: #{down_forward.5} parent=39 // pred_region
        %p201 = scmp.lt.s32.totalorder %s15, 1
        %s202 = scalar_select %p201, %s15, 1
        %s203 = smul.addr %s202, 8
        %s204 = scalar_lea.vmem %s3, %s203
      $region44: #{down_forward.5} parent=39 // pred_fallthru
        _
    $region40: #{down_forward.5} parent=5 // pred_fallthru
      _
  $region6: #{down_forward.5} parent=0 // loop_footer
    %s13 = sadd.s32 1, %s9
  $region7: #{down_forward.5} parent=0 // loop_footer_branch
    %8 = sbr.rel target = $region3
  $region8: #{down_forward.5} parent=0 // loop_exit
    _

// kernel: down_forward.4
$region0: #{down_forward.4}
  #allocation0 [shape = 'u32[]', space=smem, size = 0x4, offset = 0x4, fixed_abs, tag = 'smem constant byte address 0x4 - core index']
  #allocation1 [shape = 'u32[144,128]{1,0:T(1,128)}', space=vmem, size = 0x12000, scoped, tag = 'internal scratch']
  #allocation2 [shape = 'f32[10,10,8]{2,1,0:T(8,128)}', space=vmem, size = 0x14000, scoped, tag = 'scratch operand']
  %s0 = inlined_call_operand.vmem [shape: f32[2,64,8], index: 0, kind: input, shape index: {}]
  %s1 = inlined_call_operand.vmem [shape: f32[1,8], index: 1, kind: input, shape index: {}]
  %s2 = inlined_call_operand.vmem [shape: f32[1,8], index: 2, kind: input, shape index: {}]
  %s3 = inlined_call_operand.vmem [shape: f32[72,8], index: 3, kind: input, shape index: {}]
  %s4 = inlined_call_operand.vmem [shape: f32[2,64,8], index: 4, kind: output, shape index: {0}]
  %s5 = inlined_call_operand.vmem [shape: f32[2,2,8], index: 5, kind: output, shape index: {1}]
  %6 = xla_tuple %s4, %s5
  %s7 = sld [smem:[#allocation0]]
  $region57: #{down_forward.4} parent=0
    _
  %s9 = ssub.s32 1, %s7
  %s10 = scalar_select 0, %s9, %s7
  loop: start=0, step=1, limit=4
  $region2: #{down_forward.4} parent=0 // loop_pre_header
    _
  $region3: #{down_forward.4} parent=0 // loop_header
    %s12 = sphi 0, %s16
    %p13 = scmp.ge.s32.totalorder %s12, 4
    %s22 = sphi 0, %s24
    %s25 = sphi 0, %s22
    %s26 = sphi 0, %s25
    %s42 = sphi 0, %s26
    %s46 = sphi 0, %s46
    %s48 = sphi 0, %s46
    %s49 = sphi 0, %s48
    %s63 = sphi 0, %s49
    %s67 = sphi 0, %s67
    %s69 = sphi 0, %s67
    %s70 = sphi 0, %s69
    %s84 = sphi 0, %s70
    %s88 = sphi 0, %s88
    %s90 = sphi 0, %s88
    %s91 = sphi 0, %s90
    %s105 = sphi 0, %s91
    %s111 = sphi 0, %s113
    %s114 = sphi 0, %s111
    %s115 = sphi 0, %s114
    %s131 = sphi 0, %s115
    %s137 = sphi 0, %s139
    %s140 = sphi 0, %s137
    %s141 = sphi 0, %s140
    %s157 = sphi 0, %s141
  $region4: #{down_forward.4} parent=0 // loop_header_branch
    %15 = sbr.rel (%p13) target = $region8
  $region5: #{down_forward.4} parent=0 // loop_body
    %s17 = ssub.s32 %s12, 1
    %s18 = ssub.s32 %s12, 2
    %s19 = sadd.s32 %s12, 1
    %s20 = ssub.s32 %s12, %s19
    %p21 = scmp.eq.s32.totalorder %s20, 0
    %s23 = sadd.s32 %s22, 1
    %s24 = scalar_select %p21, %s22, %s23
    %p27 = pneg %p21
    %p28 = scmp.eq.s32.totalorder %s12, 1
    %p29 = por %p27, %p28
    %p30 = scmp.ne.s32.totalorder %s22, %s25
    %p31 = scmp.eq.s32.totalorder %s12, 0
    %p32 = por %p30, %p31
    %p33 = scmp.ne.s32.totalorder %s22, %s25
    %p34 = scmp.eq.s32.totalorder %s17, 1
    %p35 = por %p33, %p34
    %p36 = scmp.ne.s32.totalorder %s25, %s26
    %p37 = scmp.eq.s32.totalorder %s17, 0
    %p38 = por %p36, %p37
    %p39 = scmp.ne.s32.totalorder %s25, %s26
    %p40 = scmp.eq.s32.totalorder %s18, 1
    %p41 = por %p39, %p40
    %p43 = scmp.ne.s32.totalorder %s26, %s42
    %p44 = scmp.eq.s32.totalorder %s18, 0
    %p45 = por %p43, %p44
    %s47 = sadd.s32 %s46, 1
    %p50 = scmp.eq.s32.totalorder %s12, 1
    %p51 = scmp.ne.s32.totalorder %s46, %s48
    %p52 = scmp.eq.s32.totalorder %s12, 0
    %p53 = por %p51, %p52
    %p54 = scmp.ne.s32.totalorder %s46, %s48
    %p55 = scmp.eq.s32.totalorder %s17, 1
    %p56 = por %p54, %p55
    %p57 = scmp.ne.s32.totalorder %s48, %s49
    %p58 = scmp.eq.s32.totalorder %s17, 0
    %p59 = por %p57, %p58
    %p60 = scmp.ne.s32.totalorder %s48, %s49
    %p61 = scmp.eq.s32.totalorder %s18, 1
    %p62 = por %p60, %p61
    %p64 = scmp.ne.s32.totalorder %s49, %s63
    %p65 = scmp.eq.s32.totalorder %s18, 0
    %p66 = por %p64, %p65
    %s68 = sadd.s32 %s67, 1
    %p71 = scmp.eq.s32.totalorder %s12, 1
    %p72 = scmp.ne.s32.totalorder %s67, %s69
    %p73 = scmp.eq.s32.totalorder %s12, 0
    %p74 = por %p72, %p73
    %p75 = scmp.ne.s32.totalorder %s67, %s69
    %p76 = scmp.eq.s32.totalorder %s17, 1
    %p77 = por %p75, %p76
    %p78 = scmp.ne.s32.totalorder %s69, %s70
    %p79 = scmp.eq.s32.totalorder %s17, 0
    %p80 = por %p78, %p79
    %p81 = scmp.ne.s32.totalorder %s69, %s70
    %p82 = scmp.eq.s32.totalorder %s18, 1
    %p83 = por %p81, %p82
    %p85 = scmp.ne.s32.totalorder %s70, %s84
    %p86 = scmp.eq.s32.totalorder %s18, 0
    %p87 = por %p85, %p86
    %s89 = sadd.s32 %s88, 1
    %p92 = scmp.eq.s32.totalorder %s12, 1
    %p93 = scmp.ne.s32.totalorder %s88, %s90
    %p94 = scmp.eq.s32.totalorder %s12, 0
    %p95 = por %p93, %p94
    %p96 = scmp.ne.s32.totalorder %s88, %s90
    %p97 = scmp.eq.s32.totalorder %s17, 1
    %p98 = por %p96, %p97
    %p99 = scmp.ne.s32.totalorder %s90, %s91
    %p100 = scmp.eq.s32.totalorder %s17, 0
    %p101 = por %p99, %p100
    %p102 = scmp.ne.s32.totalorder %s90, %s91
    %p103 = scmp.eq.s32.totalorder %s18, 1
    %p104 = por %p102, %p103
    %p106 = scmp.ne.s32.totalorder %s91, %s105
    %p107 = scmp.eq.s32.totalorder %s18, 0
    %p108 = por %p106, %p107
    %s109 = ssub.s32 %s12, %s19
    %p110 = scmp.eq.s32.totalorder %s109, 0
    %s112 = sadd.s32 %s111, 1
    %s113 = scalar_select %p110, %s111, %s112
    %p116 = pneg %p110
    %p117 = scmp.eq.s32.totalorder %s12, 1
    %p118 = por %p116, %p117
    %p119 = scmp.ne.s32.totalorder %s111, %s114
    %p120 = scmp.eq.s32.totalorder %s12, 0
    %p121 = por %p119, %p120
    %p122 = scmp.ne.s32.totalorder %s111, %s114
    %p123 = scmp.eq.s32.totalorder %s17, 1
    %p124 = por %p122, %p123
    %p125 = scmp.ne.s32.totalorder %s114, %s115
    %p126 = scmp.eq.s32.totalorder %s17, 0
    %p127 = por %p125, %p126
    %p128 = scmp.ne.s32.totalorder %s114, %s115
    %p129 = scmp.eq.s32.totalorder %s18, 1
    %p130 = por %p128, %p129
    %p132 = scmp.ne.s32.totalorder %s115, %s131
    %p133 = scmp.eq.s32.totalorder %s18, 0
    %p134 = por %p132, %p133
    %s135 = ssub.s32 %s12, %s19
    %p136 = scmp.eq.s32.totalorder %s135, 0
    %s138 = sadd.s32 %s137, 1
    %s139 = scalar_select %p136, %s137, %s138
    %p142 = pneg %p136
    %p143 = scmp.eq.s32.totalorder %s12, 1
    %p144 = por %p142, %p143
    %p145 = scmp.ne.s32.totalorder %s137, %s140
    %p146 = scmp.eq.s32.totalorder %s12, 0
    %p147 = por %p145, %p146
    %p148 = scmp.ne.s32.totalorder %s137, %s140
    %p149 = scmp.eq.s32.totalorder %s17, 1
    %p150 = por %p148, %p149
    %p151 = scmp.ne.s32.totalorder %s140, %s141
    %p152 = scmp.eq.s32.totalorder %s17, 0
    %p153 = por %p151, %p152
    %p154 = scmp.ne.s32.totalorder %s140, %s141
    %p155 = scmp.eq.s32.totalorder %s18, 1
    %p156 = por %p154, %p155
    %p158 = scmp.ne.s32.totalorder %s141, %s157
    %p159 = scmp.eq.s32.totalorder %s18, 0
    %p160 = por %p158, %p159
    %p161 = scmp.le.s32.totalorder 1, %s12
    %p162 = scmp.lt.s32.totalorder %s12, 3
    %p163 = pnand %p161, %p162
    %p164 = pneg %p163
    // Predicated region
    $region9: #{down_forward.4} parent=5 // pred_check
      _
    $region10: #{down_forward.4} parent=5 // pred_check_branch
      %166 = sbr.rel (%p163) target = $region12
    $region11: #{down_forward.4} parent=5 // pred_region
      %s167 = ssub.s32 %s12, 1
      // Predicated region
      $region13: #{down_forward.4} parent=11 // pred_check
        %p168 = pneg %p59
      $region14: #{down_forward.4} parent=11 // pred_check_branch
        %170 = sbr.rel (%p168) target = $region16
      $region15: #{down_forward.4} parent=11 // pred_region
        _
      $region16: #{down_forward.4} parent=11 // pred_fallthru
        _
      // Predicated region
      $region17: #{down_forward.4} parent=11 // pred_check
        %p171 = pneg %p80
      $region18: #{down_forward.4} parent=11 // pred_check_branch
        %173 = sbr.rel (%p171) target = $region20
      $region19: #{down_forward.4} parent=11 // pred_region
        _
      $region20: #{down_forward.4} parent=11 // pred_fallthru
        _
      // Predicated region
      $region21: #{down_forward.4} parent=11 // pred_check
        %p174 = pneg %p101
      $region22: #{down_forward.4} parent=11 // pred_check_branch
        %176 = sbr.rel (%p174) target = $region24
      $region23: #{down_forward.4} parent=11 // pred_region
        _
      $region24: #{down_forward.4} parent=11 // pred_fallthru
        _
    $region12: #{down_forward.4} parent=5 // pred_fallthru
      _
    %p177 = scmp.lt.s32.totalorder %s12, 2
    // Predicated region
    $region25: #{down_forward.4} parent=5 // pred_check
      %p178 = pneg %p177
    $region26: #{down_forward.4} parent=5 // pred_check_branch
      %180 = sbr.rel (%p178) target = $region28
    $region27: #{down_forward.4} parent=5 // pred_region
      // Predicated region
      $region29: #{down_forward.4} parent=27 // pred_check
        %p181 = pneg %p32
      $region30: #{down_forward.4} parent=27 // pred_check_branch
        %183 = sbr.rel (%p181) target = $region32
      $region31: #{down_forward.4} parent=27 // pred_region
        %p184 = scmp.lt.s32.totalorder %s12, 1
        %s185 = scalar_select %p184, %s12, 1
        %s186 = smul.addr %s185, 8
        %s187 = smul.addr %s186, 8
        %s188 = scalar_lea.vmem %s0, %s187
      $region32: #{down_forward.4} parent=27 // pred_fallthru
        _
    $region28: #{down_forward.4} parent=5 // pred_fallthru
      _
    %p189 = scmp.le.s32.totalorder 1, %s12
    %p190 = scmp.lt.s32.totalorder %s12, 3
    %p191 = pnand %p189, %p190
    %p192 = pneg %p191
    // Predicated region
    $region33: #{down_forward.4} parent=5 // pred_check
      _
    $region34: #{down_forward.4} parent=5 // pred_check_branch
      %194 = sbr.rel (%p191) target = $region36
    $region35: #{down_forward.4} parent=5 // pred_region
      %s195 = ssub.s32 %s12, 1
      %p196 = scmp.lt.s32.totalorder %s17, 1
      %s197 = scalar_select %p196, %s17, 1
      %s198 = smul.addr %s197, 8
      %s199 = smul.addr %s198, 8
      %s200 = scalar_lea.vmem %s0, %s199
      %p201 = pneg %p38
      %p202 = pneg %p35
      %p203 = pneg %p59
      %p204 = pneg %p56
      %p205 = pneg %p80
      %p206 = pneg %p77
      %p207 = pneg %p101
      %p208 = pneg %p98
      %p209 = pneg %p127
      %p210 = pneg %p124
      %p211 = scmp.lt.s32.totalorder %s17, 1
      %s212 = scalar_select %p211, %s17, 1
      %s213 = smul.addr %s212, 8
      %s214 = smul.addr %s213, 8
      %s215 = scalar_lea.vmem %s4, %s214
      %p216 = pneg %p153
      %p217 = pneg %p150
      %p218 = scmp.lt.s32.totalorder %s17, 1
      %s219 = scalar_select %p218, %s17, 1
      %s220 = smul.addr %s219, 2
      %s221 = scalar_lea.vmem %s5, %s220
      %p222 = scmp.lt.s32.totalorder %s17, 1
      %s223 = scalar_select %p222, %s17, 1
      %s224 = smul.addr %s223, 8
      %s225 = smul.addr %s224, 8
      %s226 = scalar_lea.vmem %s0, %s225
      %p227 = scmp.lt.s32.totalorder %s17, 1
      %s228 = scalar_select %p227, %s17, 1
      %s229 = smul.addr %s228, 8
      %s230 = smul.addr %s229, 8
      %s231 = scalar_lea.vmem %s4, %s230
      %p232 = scmp.lt.s32.totalorder %s17, 1
      %s233 = scalar_select %p232, %s17, 1
      %s234 = smul.addr %s233, 2
      %s235 = scalar_lea.vmem %s5, %s234
      %v236 = vld [vmem:[%s226] sm:$0xff]
      %v237 = vld [vmem:[%s226 + $0x8] sm:$0xff]
      %v238 = vld [vmem:[%s226 + $0x10] sm:$0xff]
      %v239 = vld [vmem:[%s226 + $0x18] sm:$0xff]
      %v240 = vld [vmem:[%s226 + $0x20] sm:$0xff]
      %v241 = vld [vmem:[%s226 + $0x28] sm:$0xff]
      %v242 = vld [vmem:[%s226 + $0x30] sm:$0xff]
      %v243 = vld [vmem:[%s226 + $0x38] sm:$0xff]
      %v244 = vld [vmem:[%s1] sm:$0x1]
      %v246 = vlaneseq
      %v247 = vshrl.u32 %v246, 7
      %v248 = vsub.s32 0, %v247
      %v249 = vrot.slane %v244, %v248
      %v251 = vmul.f32 %v236, %v249
      %v252 = vmul.f32 %v237, %v249
      %v253 = vmul.f32 %v238, %v249
      %v254 = vmul.f32 %v239, %v249
      %v255 = vmul.f32 %v240, %v249
      %v256 = vmul.f32 %v241, %v249
      %v257 = vmul.f32 %v242, %v249
      %v258 = vmul.f32 %v243, %v249
      %v259 = vld [vmem:[%s2] sm:$0x1]
      %v261 = vlaneseq
      %v262 = vshrl.u32 %v261, 7
      %v263 = vsub.s32 0, %v262
      %v264 = vrot.slane %v259, %v263
      %v266 = vadd.f32 %v251, %v264
      %v267 = vadd.f32 %v252, %v264
      %v268 = vadd.f32 %v253, %v264
      %v269 = vadd.f32 %v254, %v264
      %v270 = vadd.f32 %v255, %v264
      %v271 = vadd.f32 %v256, %v264
      %v272 = vadd.f32 %v257, %v264
      %v273 = vadd.f32 %v258, %v264
      %v274 = vmax.f32 %v266, 0.0
      %v275 = vmax.f32 %v267, 0.0
      %v276 = vmax.f32 %v268, 0.0
      %v277 = vmax.f32 %v269, 0.0
      %v278 = vmax.f32 %v270, 0.0
      %v279 = vmax.f32 %v271, 0.0
      %v280 = vmax.f32 %v272, 0.0
      %v281 = vmax.f32 %v273, 0.0
      %vm282 = vcmask 64512
      %283 = vst.msk [vmem:[#allocation2] sm:$0xff] %vm282, 0.0
      %vm284 = vcmask 58368
      %285 = vst.msk [vmem:[#allocation2 + $0x8] sm:$0x3] %vm284, 0.0
      %s286 = scalar_lea.vmem [#allocation2], 144
      %287 = vst.msk [vmem:[%s286] sm:$0xff] %vm282, 0.0
      %288 = vst.msk [vmem:[%s286 + $0x8] sm:$0x3] %vm284, 0.0
      %s289 = scalar_lea.vmem [#allocation2], 16
      %vm290 = vcmask 57344
      %291 = vst.msk [vmem:[%s289] sm:$0x1] %vm290, 0.0
      %292 = vst.msk [vmem:[%s289 + $0x10] sm:$0x1] %vm290, 0.0
      %293 = vst.msk [vmem:[%s289 + $0x20] sm:$0x1] %vm290, 0.0
      %294 = vst.msk [vmem:[%s289 + $0x30] sm:$0x1] %vm290, 0.0
      %295 = vst.msk [vmem:[%s289 + $0x40] sm:$0x1] %vm290, 0.0
      %296 = vst.msk [vmem:[%s289 + $0x50] sm:$0x1] %vm290, 0.0
      %297 = vst.msk [vmem:[%s289 + $0x60] sm:$0x1] %vm290, 0.0
      %298 = vst.msk [vmem:[%s289 + $0x70] sm:$0x1] %vm290, 0.0
      %299 = vst.msk [vmem:[%s289 + $0x9] sm:$0x1] %vm290, 0.0
      %300 = vst.msk [vmem:[%s289 + $0x19] sm:$0x1] %vm290, 0.0
      %301 = vst.msk [vmem:[%s289 + $0x29] sm:$0x1] %vm290, 0.0
      %302 = vst.msk [vmem:[%s289 + $0x39] sm:$0x1] %vm290, 0.0
      %303 = vst.msk [vmem:[%s289 + $0x49] sm:$0x1] %vm290, 0.0
      %304 = vst.msk [vmem:[%s289 + $0x59] sm:$0x1] %vm290, 0.0
      %305 = vst.msk [vmem:[%s289 + $0x69] sm:$0x1] %vm290, 0.0
      %306 = vst.msk [vmem:[%s289 + $0x79] sm:$0x1] %vm290, 0.0
      %307 = vst.msk [vmem:[%s289 + $0x1] sm:$0xff] %vm282, %v274
      %308 = vst.msk [vmem:[%s289 + $0x11] sm:$0xff] %vm282, %v275
      %309 = vst.msk [vmem:[%s289 + $0x21] sm:$0xff] %vm282, %v276
      %310 = vst.msk [vmem:[%s289 + $0x31] sm:$0xff] %vm282, %v277
      %311 = vst.msk [vmem:[%s289 + $0x41] sm:$0xff] %vm282, %v278
      %312 = vst.msk [vmem:[%s289 + $0x51] sm:$0xff] %vm282, %v279
      %313 = vst.msk [vmem:[%s289 + $0x61] sm:$0xff] %vm282, %v280
      %314 = vst.msk [vmem:[%s289 + $0x71] sm:$0xff] %vm282, %v281
      %v315 = vld [vmem:[#allocation2] sm:$0xff]
      %v316 = vld [vmem:[#allocation2 + $0x10] sm:$0xff]
      %v317 = vld [vmem:[#allocation2 + $0x20] sm:$0xff]
      %v318 = vld [vmem:[#allocation2 + $0x30] sm:$0xff]
      %v319 = vld [vmem:[#allocation2 + $0x40] sm:$0xff]
      %v320 = vld [vmem:[#allocation2 + $0x50] sm:$0xff]
      %v321 = vld [vmem:[#allocation2 + $0x60] sm:$0xff]
      %v322 = vld [vmem:[#allocation2 + $0x70] sm:$0xff]
      %v323 = vld [vmem:[#allocation2 + $0x1] sm:$0xff]
      %v324 = vld [vmem:[#allocation2 + $0x11] sm:$0xff]
      %v325 = vld [vmem:[#allocation2 + $0x21] sm:$0xff]
      %v326 = vld [vmem:[#allocation2 + $0x31] sm:$0xff]
      %v327 = vld [vmem:[#allocation2 + $0x41] sm:$0xff]
      %v328 = vld [vmem:[#allocation2 + $0x51] sm:$0xff]
      %v329 = vld [vmem:[#allocation2 + $0x61] sm:$0xff]
      %v330 = vld [vmem:[#allocation2 + $0x71] sm:$0xff]
      %v331 = vld [vmem:[#allocation2 + $0x2] sm:$0xff]
      %v332 = vld [vmem:[#allocation2 + $0x12] sm:$0xff]
      %v333 = vld [vmem:[#allocation2 + $0x22] sm:$0xff]
      %v334 = vld [vmem:[#allocation2 + $0x32] sm:$0xff]
      %v335 = vld [vmem:[#allocation2 + $0x42] sm:$0xff]
      %v336 = vld [vmem:[#allocation2 + $0x52] sm:$0xff]
      %v337 = vld [vmem:[#allocation2 + $0x62] sm:$0xff]
      %v338 = vld [vmem:[#allocation2 + $0x72] sm:$0xff]
      %v339 = vld [vmem:[%s289] sm:$0xff]
      %v340 = vld [vmem:[%s289 + $0x10] sm:$0xff]
      %v341 = vld [vmem:[%s289 + $0x20] sm:$0xff]
      %v342 = vld [vmem:[%s289 + $0x30] sm:$0xff]
      %v343 = vld [vmem:[%s289 + $0x40] sm:$0xff]
      %v344 = vld [vmem:[%s289 + $0x50] sm:$0xff]
      %v345 = vld [vmem:[%s289 + $0x60] sm:$0xff]
      %v346 = vld [vmem:[%s289 + $0x70] sm:$0xff]
      %v347 = vld [vmem:[%s289 + $0x1] sm:$0xff]
      %v348 = vld [vmem:[%s289 + $0x11] sm:$0xff]
      %v349 = vld [vmem:[%s289 + $0x21] sm:$0xff]
      %v350 = vld [vmem:[%s289 + $0x31] sm:$0xff]
      %v351 = vld [vmem:[%s289 + $0x41] sm:$0xff]
      %v352 = vld [vmem:[%s289 + $0x51] sm:$0xff]
      %v353 = vld [vmem:[%s289 + $0x61] sm:$0xff]
      %v354 = vld [vmem:[%s289 + $0x71] sm:$0xff]
      %v355 = vld [vmem:[%s289 + $0x2] sm:$0xff]
      %v356 = vld [vmem:[%s289 + $0x12] sm:$0xff]
      %v357 = vld [vmem:[%s289 + $0x22] sm:$0xff]
      %v358 = vld [vmem:[%s289 + $0x32] sm:$0xff]
      %v359 = vld [vmem:[%s289 + $0x42] sm:$0xff]
      %v360 = vld [vmem:[%s289 + $0x52] sm:$0xff]
      %v361 = vld [vmem:[%s289 + $0x62] sm:$0xff]
      %v362 = vld [vmem:[%s289 + $0x72] sm:$0xff]
      %s363 = scalar_lea.vmem [#allocation2], 32
      %v364 = vld [vmem:[%s363] sm:$0xff]
      %v365 = vld [vmem:[%s363 + $0x10] sm:$0xff]
      %v366 = vld [vmem:[%s363 + $0x20] sm:$0xff]
      %v367 = vld [vmem:[%s363 + $0x30] sm:$0xff]
      %v368 = vld [vmem:[%s363 + $0x40] sm:$0xff]
      %v369 = vld [vmem:[%s363 + $0x50] sm:$0xff]
      %v370 = vld [vmem:[%s363 + $0x60] sm:$0xff]
      %v371 = vld [vmem:[%s363 + $0x70] sm:$0xff]
      %v372 = vld [vmem:[%s363 + $0x1] sm:$0xff]
      %v373 = vld [vmem:[%s363 + $0x11] sm:$0xff]
      %v374 = vld [vmem:[%s363 + $0x21] sm:$0xff]
      %v375 = vld [vmem:[%s363 + $0x31] sm:$0xff]
      %v376 = vld [vmem:[%s363 + $0x41] sm:$0xff]
      %v377 = vld [vmem:[%s363 + $0x51] sm:$0xff]
      %v378 = vld [vmem:[%s363 + $0x61] sm:$0xff]
      %v379 = vld [vmem:[%s363 + $0x71] sm:$0xff]
      %v380 = vld [vmem:[%s363 + $0x2] sm:$0xff]
      %v381 = vld [vmem:[%s363 + $0x12] sm:$0xff]
      %v382 = vld [vmem:[%s363 + $0x22] sm:$0xff]
      %v383 = vld [vmem:[%s363 + $0x32] sm:$0xff]
      %v384 = vld [vmem:[%s363 + $0x42] sm:$0xff]
      %v385 = vld [vmem:[%s363 + $0x52] sm:$0xff]
      %v386 = vld [vmem:[%s363 + $0x62] sm:$0xff]
      %v387 = vld [vmem:[%s363 + $0x72] sm:$0xff]
      %396 = vrot.lane.b32.xlu0 %v323, 8
      %v397 = vpop.permute.xlu0 %396
      %398 = vrot.lane.b32.xlu0 %v324, 8
      %v399 = vpop.permute.xlu0 %398
      %400 = vrot.lane.b32.xlu0 %v325, 8
      %v401 = vpop.permute.xlu0 %400
      %402 = vrot.lane.b32.xlu0 %v326, 8
      %v403 = vpop.permute.xlu0 %402
      %404 = vrot.lane.b32.xlu0 %v327, 8
      %v405 = vpop.permute.xlu0 %404
      %406 = vrot.lane.b32.xlu0 %v328, 8
      %v407 = vpop.permute.xlu0 %406
      %408 = vrot.lane.b32.xlu0 %v329, 8
      %v409 = vpop.permute.xlu0 %408
      %410 = vrot.lane.b32.xlu0 %v330, 8
      %v411 = vpop.permute.xlu0 %410
      %428 = vrot.lane.b32.xlu0 %v331, 16
      %v429 = vpop.permute.xlu0 %428
      %430 = vrot.lane.b32.xlu0 %v332, 16
      %v431 = vpop.permute.xlu0 %430
      %432 = vrot.lane.b32.xlu0 %v333, 16
      %v433 = vpop.permute.xlu0 %432
      %434 = vrot.lane.b32.xlu0 %v334, 16
      %v435 = vpop.permute.xlu0 %434
      %436 = vrot.lane.b32.xlu0 %v335, 16
      %v437 = vpop.permute.xlu0 %436
      %438 = vrot.lane.b32.xlu0 %v336, 16
      %v439 = vpop.permute.xlu0 %438
      %440 = vrot.lane.b32.xlu0 %v337, 16
      %v441 = vpop.permute.xlu0 %440
      %442 = vrot.lane.b32.xlu0 %v338, 16
      %v443 = vpop.permute.xlu0 %442
      %460 = vrot.lane.b32.xlu0 %v339, 24
      %v461 = vpop.permute.xlu0 %460
      %462 = vrot.lane.b32.xlu0 %v340, 24
      %v463 = vpop.permute.xlu0 %462
      %464 = vrot.lane.b32.xlu0 %v341, 24
      %v465 = vpop.permute.xlu0 %464
      %466 = vrot.lane.b32.xlu0 %v342, 24
      %v467 = vpop.permute.xlu0 %466
      %468 = vrot.lane.b32.xlu0 %v343, 24
      %v469 = vpop.permute.xlu0 %468
      %470 = vrot.lane.b32.xlu0 %v344, 24
      %v471 = vpop.permute.xlu0 %470
      %472 = vrot.lane.b32.xlu0 %v345, 24
      %v473 = vpop.permute.xlu0 %472
      %474 = vrot.lane.b32.xlu0 %v346, 24
      %v475 = vpop.permute.xlu0 %474
      %492 = vrot.lane.b32.xlu0 %v347, 32
      %v493 = vpop.permute.xlu0 %492
      %494 = vrot.lane.b32.xlu0 %v348, 32
      %v495 = vpop.permute.xlu0 %494
      %496 = vrot.lane.b32.xlu0 %v349, 32
      %v497 = vpop.permute.xlu0 %496
      %498 = vrot.lane.b32.xlu0 %v350, 32
      %v499 = vpop.permute.xlu0 %498
      %500 = vrot.lane.b32.xlu0 %v351, 32
      %v501 = vpop.permute.xlu0 %500
      %502 = vrot.lane.b32.xlu0 %v352, 32
      %v503 = vpop.permute.xlu0 %502
      %504 = vrot.lane.b32.xlu0 %v353, 32
      %v505 = vpop.permute.xlu0 %504
      %506 = vrot.lane.b32.xlu0 %v354, 32
      %v507 = vpop.permute.xlu0 %506
      %524 = vrot.lane.b32.xlu0 %v355, 40
      %v525 = vpop.permute.xlu0 %524
      %526 = vrot.lane.b32.xlu0 %v356, 40
      %v527 = vpop.permute.xlu0 %526
      %528 = vrot.lane.b32.xlu0 %v357, 40
      %v529 = vpop.permute.xlu0 %528
      %530 = vrot.lane.b32.xlu0 %v358, 40
      %v531 = vpop.permute.xlu0 %530
      %532 = vrot.lane.b32.xlu0 %v359, 40
      %v533 = vpop.permute.xlu0 %532
      %534 = vrot.lane.b32.xlu0 %v360, 40
      %v535 = vpop.permute.xlu0 %534
      %536 = vrot.lane.b32.xlu0 %v361, 40
      %v537 = vpop.permute.xlu0 %536
      %538 = vrot.lane.b32.xlu0 %v362, 40
      %v539 = vpop.permute.xlu0 %538
      %556 = vrot.lane.b32.xlu0 %v364, 48
      %v557 = vpop.permute.xlu0 %556
      %558 = vrot.lane.b32.xlu0 %v365, 48
      %v559 = vpop.permute.xlu0 %558
      %560 = vrot.lane.b32.xlu0 %v366, 48
      %v561 = vpop.permute.xlu0 %560
      %562 = vrot.lane.b32.xlu0 %v367, 48
      %v563 = vpop.permute.xlu0 %562
      %564 = vrot.lane.b32.xlu0 %v368, 48
      %v565 = vpop.permute.xlu0 %564
      %566 = vrot.lane.b32.xlu0 %v369, 48
      %v567 = vpop.permute.xlu0 %566
      %568 = vrot.lane.b32.xlu0 %v370, 48
      %v569 = vpop.permute.xlu0 %568
      %570 = vrot.lane.b32.xlu0 %v371, 48
      %v571 = vpop.permute.xlu0 %570
      %588 = vrot.lane.b32.xlu0 %v372, 56
      %v589 = vpop.permute.xlu0 %588
      %590 = vrot.lane.b32.xlu0 %v373, 56
      %v591 = vpop.permute.xlu0 %590
      %592 = vrot.lane.b32.xlu0 %v374, 56
      %v593 = vpop.permute.xlu0 %592
      %594 = vrot.lane.b32.xlu0 %v375, 56
      %v595 = vpop.permute.xlu0 %594
      %596 = vrot.lane.b32.xlu0 %v376, 56
      %v597 = vpop.permute.xlu0 %596
      %598 = vrot.lane.b32.xlu0 %v377, 56
      %v599 = vpop.permute.xlu0 %598
      %600 = vrot.lane.b32.xlu0 %v378, 56
      %v601 = vpop.permute.xlu0 %600
      %602 = vrot.lane.b32.xlu0 %v379, 56
      %v603 = vpop.permute.xlu0 %602
      %620 = vrot.lane.b32.xlu0 %v380, 64
      %v621 = vpop.permute.xlu0 %620
      %622 = vrot.lane.b32.xlu0 %v381, 64
      %v623 = vpop.permute.xlu0 %622
      %624 = vrot.lane.b32.xlu0 %v382, 64
      %v625 = vpop.permute.xlu0 %624
      %626 = vrot.lane.b32.xlu0 %v383, 64
      %v627 = vpop.permute.xlu0 %626
      %628 = vrot.lane.b32.xlu0 %v384, 64
      %v629 = vpop.permute.xlu0 %628
      %630 = vrot.lane.b32.xlu0 %v385, 64
      %v631 = vpop.permute.xlu0 %630
      %632 = vrot.lane.b32.xlu0 %v386, 64
      %v633 = vpop.permute.xlu0 %632
      %634 = vrot.lane.b32.xlu0 %v387, 64
      %v635 = vpop.permute.xlu0 %634
      %v644 = vsel %vm282, %v315, %v397
      %v645 = vsel %vm282, %v316, %v399
      %v646 = vsel %vm282, %v317, %v401
      %v647 = vsel %vm282, %v318, %v403
      %v648 = vsel %vm282, %v319, %v405
      %v649 = vsel %vm282, %v320, %v407
      %v650 = vsel %vm282, %v321, %v409
      %v651 = vsel %vm282, %v322, %v411
      %vm652 = vcmask 130048
      %v653 = vsel %vm652, %v644, %v429
      %v654 = vsel %vm652, %v645, %v431
      %v655 = vsel %vm652, %v646, %v433
      %v656 = vsel %vm652, %v647, %v435
      %v657 = vsel %vm652, %v648, %v437
      %v658 = vsel %vm652, %v649, %v439
      %v659 = vsel %vm652, %v650, %v441
      %v660 = vsel %vm652, %v651, %v443
      %vm661 = vcmask 195584
      %v662 = vsel %vm661, %v653, %v461
      %v663 = vsel %vm661, %v654, %v463
      %v664 = vsel %vm661, %v655, %v465
      %v665 = vsel %vm661, %v656, %v467
      %v666 = vsel %vm661, %v657, %v469
      %v667 = vsel %vm661, %v658, %v471
      %v668 = vsel %vm661, %v659, %v473
      %v669 = vsel %vm661, %v660, %v475
      %vm670 = vcmask 261120
      %v671 = vsel %vm670, %v662, %v493
      %v672 = vsel %vm670, %v663, %v495
      %v673 = vsel %vm670, %v664, %v497
      %v674 = vsel %vm670, %v665, %v499
      %v675 = vsel %vm670, %v666, %v501
      %v676 = vsel %vm670, %v667, %v503
      %v677 = vsel %vm670, %v668, %v505
      %v678 = vsel %vm670, %v669, %v507
      %vm679 = vcmask 326656
      %v680 = vsel %vm679, %v671, %v525
      %v681 = vsel %vm679, %v672, %v527
      %v682 = vsel %vm679, %v673, %v529
      %v683 = vsel %vm679, %v674, %v531
      %v684 = vsel %vm679, %v675, %v533
      %v685 = vsel %vm679, %v676, %v535
      %v686 = vsel %vm679, %v677, %v537
      %v687 = vsel %vm679, %v678, %v539
      %vm688 = vcmask 392192
      %v689 = vsel %vm688, %v680, %v557
      %v690 = vsel %vm688, %v681, %v559
      %v691 = vsel %vm688, %v682, %v561
      %v692 = vsel %vm688, %v683, %v563
      %v693 = vsel %vm688, %v684, %v565
      %v694 = vsel %vm688, %v685, %v567
      %v695 = vsel %vm688, %v686, %v569
      %v696 = vsel %vm688, %v687, %v571
      %vm697 = vcmask 457728
      %v698 = vsel %vm697, %v689, %v589
      %v699 = vsel %vm697, %v690, %v591
      %v700 = vsel %vm697, %v691, %v593
      %v701 = vsel %vm697, %v692, %v595
      %v702 = vsel %vm697, %v693, %v597
      %v703 = vsel %vm697, %v694, %v599
      %v704 = vsel %vm697, %v695, %v601
      %v705 = vsel %vm697, %v696, %v603
      %vm706 = vcmask 523264
      %v707 = vsel %vm706, %v698, %v621
      %v708 = vsel %vm706, %v699, %v623
      %v709 = vsel %vm706, %v700, %v625
      %v710 = vsel %vm706, %v701, %v627
      %v711 = vsel %vm706, %v702, %v629
      %v712 = vsel %vm706, %v703, %v631
      %v713 = vsel %vm706, %v704, %v633
      %v714 = vsel %vm706, %v705, %v635
      %v715 = vld [vmem:[%s3] sm:$0xff]
      %v716 = vld [vmem:[%s3 + $0x8] sm:$0xff]
      %v717 = vld [vmem:[%s3 + $0x10] sm:$0xff]
      %v718 = vld [vmem:[%s3 + $0x18] sm:$0xff]
      %v719 = vld [vmem:[%s3 + $0x20] sm:$0xff]
      %v720 = vld [vmem:[%s3 + $0x28] sm:$0xff]
      %v721 = vld [vmem:[%s3 + $0x30] sm:$0xff]
      %v722 = vld [vmem:[%s3 + $0x38] sm:$0xff]
      %v723 = vld [vmem:[%s3 + $0x40] sm:$0xff]
      %vm724 = vcmask 588800
      %v726 = vsel %vm724, %v707, 0
      %v729 = vsel %vm724, %v708, 0
      %v732 = vsel %vm724, %v709, 0
      %v735 = vsel %vm724, %v710, 0
      %v738 = vsel %vm724, %v711, 0
      %v741 = vsel %vm724, %v712, 0
      %v744 = vsel %vm724, %v713, 0
      %v747 = vsel %vm724, %v714, 0
      %749 = vmatprep.subr.mxu0 0.0
      %750 = vmatpush1.msra.mxu0 %v715
      %751 = vmatprep.subr.mxu0 0.0
      %752 = vmatpush1.msra.mxu0 %v716
      %753 = vmatprep.subr.mxu0 0.0
      %754 = vmatpush1.msra.mxu0 %v717
      %755 = vmatprep.subr.mxu0 0.0
      %756 = vmatpush1.msra.mxu0 %v718
      %757 = vmatprep.subr.mxu0 0.0
      %758 = vmatpush1.msra.mxu0 %v719
      %759 = vmatprep.subr.mxu0 0.0
      %760 = vmatpush1.msra.mxu0 %v720
      %761 = vmatprep.subr.mxu0 0.0
      %762 = vmatpush1.msra.mxu0 %v721
      %763 = vmatprep.subr.mxu0 0.0
      %764 = vmatpush1.msra.mxu0 %v722
      %765 = vmatprep.subr.mxu0 0.0
      %766 = vmatpush1.msra.mxu0 %v723
      %767 = vmatprep.subr.mxu0 0.0
      %768 = vmatpush1.msra.mxu0 0.0
      %769 = vmatprep.subr.mxu0 0.0
      %770 = vmatpush1.msra.mxu0 0.0
      %771 = vmatprep.subr.mxu0 0.0
      %772 = vmatpush1.msra.mxu0 0.0
      %773 = vmatprep.subr.mxu0 0.0
      %774 = vmatpush1.msra.mxu0 0.0
      %775 = vmatprep.subr.mxu0 0.0
      %776 = vmatpush1.msra.mxu0 0.0
      %777 = vmatprep.subr.mxu0 0.0
      %778 = vmatpush1.msra.mxu0 0.0
      %779 = vmatprep.subr.mxu0 0.0
      %780 = vmatpush1.msra.mxu0 0.0
      %781 = vmatprep.subr.mxu0 0.0
      %782 = vmatpush1.msra.mxu0 0.0
      %783 = vmatprep.subr.mxu0 0.0
      %784 = vmatpush1.msra.mxu0 0.0
      %785 = vmatprep.subr.mxu0 0.0
      %786 = vmatpush1.msra.mxu0 0.0
      %787 = vmatprep.subr.mxu0 0.0
      %788 = vmatpush1.msra.mxu0 0.0
      %789 = vmatprep.subr.mxu0 0.0
      %790 = vmatpush1.msra.mxu0 0.0
      %791 = vmatprep.subr.mxu0 0.0
      %792 = vmatpush1.msra.mxu0 0.0
      %793 = vmatprep.subr.mxu0 0.0
      %794 = vmatpush1.msra.mxu0 0.0
      %795 = vmatprep.subr.mxu0 0.0
      %796 = vmatpush1.msra.mxu0 0.0
      %797 = vmatprep.subr.mxu0 0.0
      %798 = vmatpush1.msra.mxu0 0.0
      %799 = vmatprep.subr.mxu0 0.0
      %800 = vmatpush1.msra.mxu0 0.0
      %801 = vmatprep.subr.mxu0 0.0
      %802 = vmatpush1.msra.mxu0 0.0
      %803 = vmatprep.subr.mxu0 0.0
      %804 = vmatpush1.msra.mxu0 0.0
      %805 = vmatprep.subr.mxu0 0.0
      %806 = vmatpush1.msra.mxu0 0.0
      %807 = vmatprep.subr.mxu0 0.0
      %808 = vmatpush1.msra.mxu0 0.0
      %809 = vmatprep.subr.mxu0 0.0
      %810 = vmatpush1.msra.mxu0 0.0
      %811 = vmatprep.subr.mxu0 0.0
      %812 = vmatpush1.msra.mxu0 0.0
      %813 = vmatprep.mubr.f32.mxu0 0.0
      %814 = vmatmul.mubr.f32.gmra.mrb[0].mxu0 %v726
      %v815 = vpop.f32.mrb[0].mxu0
      %v816 = vadd.f32 0.0, %v815
      %v817 = vpop.f32.mrb[0].mxu0
      %818 = vmatprep.mubr.f32.mxu0 0.0
      %819 = vmatmul.mubr.f32.gmra.mrb[0].mxu0 %v729
      %v820 = vpop.f32.mrb[0].mxu0
      %v821 = vadd.f32 0.0, %v820
      %v822 = vpop.f32.mrb[0].mxu0
      %823 = vmatprep.mubr.f32.mxu0 0.0
      %824 = vmatmul.mubr.f32.gmra.mrb[0].mxu0 %v732
      %v825 = vpop.f32.mrb[0].mxu0
      %v826 = vadd.f32 0.0, %v825
      %v827 = vpop.f32.mrb[0].mxu0
      %828 = vmatprep.mubr.f32.mxu0 0.0
      %829 = vmatmul.mubr.f32.gmra.mrb[0].mxu0 %v735
      %v830 = vpop.f32.mrb[0].mxu0
      %v831 = vadd.f32 0.0, %v830
      %v832 = vpop.f32.mrb[0].mxu0
      %833 = vmatprep.mubr.f32.mxu0 0.0
      %834 = vmatmul.mubr.f32.gmra.mrb[0].mxu0 %v738
      %v835 = vpop.f32.mrb[0].mxu0
      %v836 = vadd.f32 0.0, %v835
      %v837 = vpop.f32.mrb[0].mxu0
      %838 = vmatprep.mubr.f32.mxu0 0.0
      %839 = vmatmul.mubr.f32.gmra.mrb[0].mxu0 %v741
      %v840 = vpop.f32.mrb[0].mxu0
      %v841 = vadd.f32 0.0, %v840
      %v842 = vpop.f32.mrb[0].mxu0
      %843 = vmatprep.mubr.f32.mxu0 0.0
      %844 = vmatmul.mubr.f32.gmra.mrb[0].mxu0 %v744
      %v845 = vpop.f32.mrb[0].mxu0
      %v846 = vadd.f32 0.0, %v845
      %v847 = vpop.f32.mrb[0].mxu0
      %848 = vmatprep.mubr.f32.mxu0 0.0
      %849 = vmatmul.mubr.f32.gmra.mrb[0].mxu0 %v747
      %v850 = vpop.f32.mrb[0].mxu0
      %v851 = vadd.f32 0.0, %v850
      %v852 = vpop.f32.mrb[0].mxu0
      %853 = vdwg.mxu0
      %854 = vst.msk [vmem:[%s231] sm:$0xff] %vm282, %v816
      %855 = vst.msk [vmem:[%s231 + $0x8] sm:$0xff] %vm282, %v821
      %856 = vst.msk [vmem:[%s231 + $0x10] sm:$0xff] %vm282, %v826
      %857 = vst.msk [vmem:[%s231 + $0x18] sm:$0xff] %vm282, %v831
      %858 = vst.msk [vmem:[%s231 + $0x20] sm:$0xff] %vm282, %v836
      %859 = vst.msk [vmem:[%s231 + $0x28] sm:$0xff] %vm282, %v841
      %860 = vst.msk [vmem:[%s231 + $0x30] sm:$0xff] %vm282, %v846
      %861 = vst.msk [vmem:[%s231 + $0x38] sm:$0xff] %vm282, %v851
      %v862 = vsel %vm282, %v816, 0.0
      %v863 = vsel %vm282, %v821, 0.0
      %v864 = vadd.f32 %v862, %v863
      %v865 = vsel %vm282, %v826, 0.0
      %v866 = vadd.f32 %v864, %v865
      %v867 = vsel %vm282, %v831, 0.0
      %v868 = vadd.f32 %v866, %v867
      %v869 = vsel %vm282, %v836, 0.0
      %v870 = vadd.f32 %v868, %v869
      %v871 = vsel %vm282, %v841, 0.0
      %v872 = vadd.f32 %v870, %v871
      %v873 = vsel %vm282, %v846, 0.0
      %v874 = vadd.f32 %v872, %v873
      %v875 = vsel %vm282, %v851, 0.0
      %v876 = vadd.f32 %v874, %v875
      %v877 = vrot.slane %v876, 4
      %v878 = vadd.f32 %v876, %v877
      %v879 = vrot.slane %v878, 2
      %v880 = vadd.f32 %v878, %v879
      %v881 = vrot.slane %v880, 1
      %v882 = vadd.f32 %v880, %v881
      %883 = vst.msk [vmem:[%s235] sm:$0x1] %vm290, %v882
      %v884 = vmul.f32 %v816, %v816
      %v885 = vmul.f32 %v821, %v821
      %v886 = vmul.f32 %v826, %v826
      %v887 = vmul.f32 %v831, %v831
      %v888 = vmul.f32 %v836, %v836
      %v889 = vmul.f32 %v841, %v841
      %v890 = vmul.f32 %v846, %v846
      %v891 = vmul.f32 %v851, %v851
      %v892 = vsel %vm282, %v884, 0.0
      %v893 = vsel %vm282, %v885, 0.0
      %v894 = vadd.f32 %v892, %v893
      %v895 = vsel %vm282, %v886, 0.0
      %v896 = vadd.f32 %v894, %v895
      %v897 = vsel %vm282, %v887, 0.0
      %v898 = vadd.f32 %v896, %v897
      %v899 = vsel %vm282, %v888, 0.0
      %v900 = vadd.f32 %v898, %v899
      %v901 = vsel %vm282, %v889, 0.0
      %v902 = vadd.f32 %v900, %v901
      %v903 = vsel %vm282, %v890, 0.0
      %v904 = vadd.f32 %v902, %v903
      %v905 = vsel %vm282, %v891, 0.0
      %v906 = vadd.f32 %v904, %v905
      %v907 = vrot.slane %v906, 4
      %v908 = vadd.f32 %v906, %v907
      %v909 = vrot.slane %v908, 2
      %v910 = vadd.f32 %v908, %v909
      %v911 = vrot.slane %v910, 1
      %v912 = vadd.f32 %v910, %v911
      %913 = vst.msk [vmem:[%s235 + $0x1] sm:$0x1] %vm290, %v912
      %p914 = scmp.lt.s32.totalorder %s17, 1
      %s915 = scalar_select %p914, %s17, 1
      %s916 = smul.addr %s915, 8
      %s917 = smul.addr %s916, 8
      %s918 = scalar_lea.vmem %s4, %s917
      %p919 = scmp.lt.s32.totalorder %s17, 1
      %s920 = scalar_select %p919, %s17, 1
      %s921 = smul.addr %s920, 2
      %s922 = scalar_lea.vmem %s5, %s921
      // Predicated region
      $region37: #{down_forward.4} parent=35 // pred_check
        %p923 = pneg %p124
      $region38: #{down_forward.4} parent=35 // pred_check_branch
        %925 = sbr.rel (%p923) target = $region40
      $region39: #{down_forward.4} parent=35 // pred_region
        _
      $region40: #{down_forward.4} parent=35 // pred_fallthru
        _
      // Predicated region
      $region41: #{down_forward.4} parent=35 // pred_check
        %p926 = pneg %p150
      $region42: #{down_forward.4} parent=35 // pred_check_branch
        %928 = sbr.rel (%p926) target = $region44
      $region43: #{down_forward.4} parent=35 // pred_region
        _
      $region44: #{down_forward.4} parent=35 // pred_fallthru
        _
    $region36: #{down_forward.4} parent=5 // pred_fallthru
      _
    %p929 = scmp.le.s32.totalorder 2, %s12
    // Predicated region
    $region45: #{down_forward.4} parent=5 // pred_check
      %p930 = pneg %p929
    $region46: #{down_forward.4} parent=5 // pred_check_branch
      %932 = sbr.rel (%p930) target = $region48
    $region47: #{down_forward.4} parent=5 // pred_region
      %s933 = ssub.s32 %s12, 2
      // Predicated region
      $region49: #{down_forward.4} parent=47 // pred_check
        %p934 = pneg %p130
      $region50: #{down_forward.4} parent=47 // pred_check_branch
        %936 = sbr.rel (%p934) target = $region52
      $region51: #{down_forward.4} parent=47 // pred_region
        %p937 = scmp.lt.s32.totalorder %s18, 1
        %s938 = scalar_select %p937, %s18, 1
        %s939 = smul.addr %s938, 8
        %s940 = smul.addr %s939, 8
        %s941 = scalar_lea.vmem %s4, %s940
      $region52: #{down_forward.4} parent=47 // pred_fallthru
        _
      // Predicated region
      $region53: #{down_forward.4} parent=47 // pred_check
        %p942 = pneg %p156
      $region54: #{down_forward.4} parent=47 // pred_check_branch
        %944 = sbr.rel (%p942) target = $region56
      $region55: #{down_forward.4} parent=47 // pred_region
        %p945 = scmp.lt.s32.totalorder %s18, 1
        %s946 = scalar_select %p945, %s18, 1
        %s947 = smul.addr %s946, 2
        %s948 = scalar_lea.vmem %s5, %s947
      $region56: #{down_forward.4} parent=47 // pred_fallthru
        _
    $region48: #{down_forward.4} parent=5 // pred_fallthru
      _
  $region6: #{down_forward.4} parent=0 // loop_footer
    %s16 = sadd.s32 1, %s12
  $region7: #{down_forward.4} parent=0 // loop_footer_branch
    %11 = sbr.rel target = $region3
  $region8: #{down_forward.4} parent=0 // loop_exit
    _

</llo_original>
